<compile_context>
chip_gen: v6e
topology: v6e:2x2x1
jax: 0.10.0
libtpu: 0.0.40
codegen_flags: <defaults>
</compile_context>

<pallas_src>
import functools
import math

import jax
import jax.numpy as jnp
from jax import lax
from jax.experimental import pallas as pl
from jax.experimental.pallas import tpu as pltpu


# ----------------------------------------------------------------------------
# Kernel 1: fused Q/K/V projections (full-width, lane-dense MXU matmuls).
# ----------------------------------------------------------------------------
def _qkv_proj_kernel(x_ref, wq_ref, wk_ref, wv_ref, bq_ref, bk_ref, bv_ref,
                     q_ref, k_ref, v_ref, *, n_heads, d_k):
    x = x_ref[...]                                          # (T, D) bf16

    def project(w_ref, b_ref, out_ref):
        # One D-wide matmul per projection (bf16 operands, f32 accumulation),
        # bias added once; then split into heads with cheap static lane slices.
        y = jnp.dot(x, w_ref[...], preferred_element_type=jnp.float32)
        y = y + b_ref[...]                                  # (T, D) f32
        for h in range(n_heads):                            # static slices only
            out_ref[h] = y[:, h * d_k:(h + 1) * d_k].astype(out_ref.dtype)

    project(wq_ref, bq_ref, q_ref)    # softmax scale already folded into Wq/bq
    project(wk_ref, bk_ref, k_ref)
    project(wv_ref, bv_ref, v_ref)


# ----------------------------------------------------------------------------
# Kernel 2: flash-style causal attention + fused output projection.
# ----------------------------------------------------------------------------
def _flash_attn_kernel(q_ref, k_ref, v_ref, wo_ref, bo_ref, o_ref,
                       m_ref, l_ref, acc_ref, *, n_heads, tile, d_model):
    q_idx = pl.program_id(1)
    kv_idx = pl.program_id(2)

    # Causal skip: KV tiles strictly above the diagonal contribute nothing
    # (their DMAs are also suppressed via the clamped index maps).
    @pl.when(kv_idx <= q_idx)
    def _():
        @pl.when(kv_idx == 0)
        def _():
            m_ref[...] = jnp.full_like(m_ref, -1e30)
            l_ref[...] = jnp.zeros_like(l_ref)
            acc_ref[...] = jnp.zeros_like(acc_ref)

        # Additive causal bias, built once per grid step (shared by all heads).
        row = q_idx * tile + lax.broadcasted_iota(jnp.int32, (tile, tile), 0)
        col = kv_idx * tile + lax.broadcasted_iota(jnp.int32, (tile, tile), 1)
        causal_bias = jnp.where(col <= row, jnp.float32(0.0), jnp.float32(-1e9))

        def head_body(h, carry):
            qh = q_ref[h]                                   # (T, d_k) bf16
            kh = k_ref[h]                                   # (T, d_k) bf16
            vh = v_ref[h]                                   # (T, d_k) bf16
            # scores = qh @ kh^T (transpose folded into the contraction).
            s = lax.dot_general(qh, kh, (((1,), (1,)), ((), ())),
                                preferred_element_type=jnp.float32)
            s = s + causal_bias
            # Online softmax update (f32 running stats in VMEM scratch).
            m_prev = m_ref[h]
            m_new = jnp.maximum(m_prev, jnp.max(s, axis=-1, keepdims=True))
            alpha = jnp.exp(m_prev - m_new)
            p = jnp.exp(s - m_new)     # TODO(synk): bf16 exp on v6e/v7x (EUP)
            l_ref[h] = alpha * l_ref[h] + jnp.sum(p, axis=-1, keepdims=True)
            acc_ref[h] = alpha * acc_ref[h] + jnp.dot(
                p.astype(jnp.bfloat16), vh, preferred_element_type=jnp.float32)
            m_ref[h] = m_new
            return carry

        # Rolled loop over heads: one head's (T, T) temporaries live at a time.
        lax.fori_loop(0, n_heads, head_body, 0)

    # Diagonal tile == last KV tile this query tile needs: normalize, apply the
    # per-head output projection (accumulated, no lane concat) and store.
    @pl.when(kv_idx == q_idx)
    def _():
        def out_body(h, acc):
            ctx = acc_ref[h] * pl.reciprocal(l_ref[h], approx=True)
            return acc + jnp.dot(ctx.astype(jnp.bfloat16), wo_ref[h],
                                 preferred_element_type=jnp.float32)

        out = lax.fori_loop(0, n_heads, out_body,
                            jnp.zeros((tile, d_model), jnp.float32))
        o_ref[...] = (out + bo_ref[...]).astype(o_ref.dtype)


# ----------------------------------------------------------------------------
# Host-side wrapper.
# ----------------------------------------------------------------------------
def _round_up(x, m):
    return (x + m - 1) // m * m


def _seq_tile(seq_len):
    # TQ == TK.  256 matches the v6e/v7x 2x256^2 MXUs (and is still fine on
    # v5e); short / awkward sequence lengths are rounded up to a sublane
    # multiple and handled by zero padding (never a full-sequence fallback).
    return 256 if seq_len >= 256 else _round_up(max(seq_len, 8), 8)


def _vmem_limit_bytes():
    # Generation-aware VMEM budget: ~3/4 of physical capacity, capped at
    # 100 MiB  ->  ~96 MiB on v5e/v6e (128 MiB phys), ~48 MiB on v7x (64 MiB).
    cap = None
    try:
        cap = getattr(pltpu.get_tpu_info(), "vmem_capacity_bytes", None)
    except Exception:
        cap = None
    if not cap:
        return 48 * 1024 * 1024
    return int(min(cap * 3 // 4, 100 * 1024 * 1024))


def _const_spec(shape, single_buffer):
    """BlockSpec for a grid-invariant (weight/bias) operand."""
    index_map = lambda *_: (0,) * len(shape)
    if single_buffer:
        # Constant index map -> no re-DMA, so a single buffer suffices
        # (halves weight VMEM; matters most on v7x's 64 MiB).
        return pl.BlockSpec(shape, index_map, pipeline_mode=pl.Buffered(1))
    return pl.BlockSpec(shape, index_map)


def mh_pooling(x, params, *, n_heads, single_buffer_weights=True):
    """x: (B, S, D) float32. params: dict of transposed weights + biases."""
    B, S, D = x.shape
    assert D % n_heads == 0
    d_k = D // n_heads
    tile = _seq_tile(S)
    s_pad = _round_up(S, tile)
    n_tiles = s_pad // tile
    scale = 1.0 / math.sqrt(d_k)

    # --- host-side (free) parameter prep ------------------------------------
    wq = (params["wqT"] * scale).astype(jnp.bfloat16)            # (D, D)
    wk = params["wkT"].astype(jnp.bfloat16)
    wv = params["wvT"].astype(jnp.bfloat16)
    wo = params["woT"].reshape(n_heads, d_k, D).astype(jnp.bfloat16)
    bq = (params["bq"] * scale).reshape(1, D).astype(jnp.float32)
    bk = params["bk"].reshape(1, D).astype(jnp.float32)
    bv = params["bv"].reshape(1, D).astype(jnp.float32)
    bo = params["bo"].reshape(1, D).astype(jnp.float32)

    # Zero-pad the sequence; padded key positions sit strictly in the "future"
    # of every real query position, so the causal mask makes padding inert.
    x_pad = jnp.pad(x, ((0, 0), (0, s_pad - S), (0, 0))).astype(jnp.bfloat16)

    vmem_limit = _vmem_limit_bytes()
    sb = single_buffer_weights

    # ---------------- Call 1: Q/K/V projections (computed once) -------------
    proj_cost = pl.CostEstimate(
        flops=int(6 * B * s_pad * D * D),
        transcendentals=0,
        bytes_accessed=int(B * s_pad * D * 2 + 3 * D * D * 2
                           + 3 * B * s_pad * D * 2),
    )
    proj_kernel = functools.partial(_qkv_proj_kernel, n_heads=n_heads, d_k=d_k)
    qkv_shape = jax.ShapeDtypeStruct((B, n_heads, s_pad, d_k), jnp.bfloat16)
    qkv_out_spec = pl.BlockSpec((None, n_heads, tile, d_k),
                                lambda b, s: (b, 0, s, 0))
    q_hm, k_hm, v_hm = pl.pallas_call(
        proj_kernel,
        out_shape=(qkv_shape, qkv_shape, qkv_shape),
        grid_spec=pltpu.PrefetchScalarGridSpec(
            num_scalar_prefetch=0,
            grid=(B, n_tiles),
            in_specs=[
                pl.BlockSpec((None, tile, D), lambda b, s: (b, s, 0)),   # x tile
                _const_spec((D, D), sb), _const_spec((D, D), sb),
                _const_spec((D, D), sb),
                _const_spec((1, D), sb), _const_spec((1, D), sb),
                _const_spec((1, D), sb),
            ],
            out_specs=(qkv_out_spec, qkv_out_spec, qkv_out_spec),
        ),
        compiler_params=pltpu.CompilerParams(
            dimension_semantics=("parallel", "parallel"),
            vmem_limit_bytes=vmem_limit),
        cost_estimate=proj_cost,
    )(x_pad, wq, wk, wv, bq, bk, bv)

    # ---------------- Call 2: flash causal attention + output projection ----
    attn_cost = pl.CostEstimate(
        # scores + PV (causal-halved) + output projection
        flops=int(2 * B * n_heads * s_pad * s_pad * d_k + 2 * B * s_pad * D * D),
        transcendentals=int(B * n_heads * s_pad * s_pad // 2),
        bytes_accessed=int(B * n_heads * s_pad * d_k * 2 * (1 + 2 * n_tiles)
                           + B * s_pad * D * 4),
    )
    attn_kernel = functools.partial(_flash_attn_kernel, n_heads=n_heads,
                                    tile=tile, d_model=D)
    head_spec_q = pl.BlockSpec((None, n_heads, tile, d_k),
                               lambda b, q, k: (b, 0, q, 0))
    # Clamp the KV block index to the causal bound -> skipped tiles re-use the
    # already-resident block (no wasted DMA).
    head_spec_kv = pl.BlockSpec((None, n_heads, tile, d_k),
                                lambda b, q, k: (b, 0, jnp.minimum(k, q), 0))
    out_pad = pl.pallas_call(
        attn_kernel,
        out_shape=jax.ShapeDtypeStruct((B, s_pad, D), jnp.float32),
        grid_spec=pltpu.PrefetchScalarGridSpec(
            num_scalar_prefetch=0,
            grid=(B, n_tiles, n_tiles),
            in_specs=[
                head_spec_q,                       # Q tile (head-major)
                head_spec_kv,                      # K tile
                head_spec_kv,                      # V tile
                _const_spec((n_heads, d_k, D), sb),  # Wo (head-major)
                _const_spec((1, D), sb),             # bo
            ],
            out_specs=pl.BlockSpec((None, tile, D), lambda b, q, k: (b, q, 0)),
            scratch_shapes=[
                pltpu.VMEM((n_heads, tile, 1), jnp.float32),     # running max
                pltpu.VMEM((n_heads, tile, 1), jnp.float32),     # running sum
                pltpu.VMEM((n_heads, tile, d_k), jnp.float32),   # running acc
            ],
        ),
        compiler_params=pltpu.CompilerParams(
            dimension_semantics=("parallel", "parallel", "arbitrary"),
            vmem_limit_bytes=vmem_limit),
        cost_estimate=attn_cost,
    )(q_hm, k_hm, v_hm, wo, bo)

    return out_pad[:, :S, :]


# ----------------------------------------------------------------------------
# Pure-JAX f32 reference mirroring the PyTorch forward (eval mode).
# ----------------------------------------------------------------------------
def mh_pooling_reference(x, params, *, n_heads):
    B, S, D = x.shape
    d_k = D // n_heads

    def proj(inp, wT, b):
        return inp @ wT + b

    q = proj(x, params["wqT"], params["bq"]).reshape(B, S, n_heads, d_k).transpose(0, 2, 1, 3)
    k = proj(x, params["wkT"], params["bk"]).reshape(B, S, n_heads, d_k).transpose(0, 2, 1, 3)
    v = proj(x, params["wvT"], params["bv"]).reshape(B, S, n_heads, d_k).transpose(0, 2, 1, 3)

    scores = jnp.einsum("bhqd,bhkd->bhqk", q, k) / math.sqrt(d_k)
    mask = jnp.tril(jnp.ones((S, S), dtype=bool))
    scores = jnp.where(mask[None, None], scores, -1.0e9)
    p = jax.nn.softmax(scores, axis=-1)
    out = jnp.einsum("bhqk,bhkd->bhqd", p, v)
    out = out.transpose(0, 2, 1, 3).reshape(B, S, D)
    return out @ params["woT"] + params["bo"]


def init_params(key, d_model):
    """Deterministic init of the 4 Linear(d_model, d_model) layers (f32)."""
    keys = jax.random.split(key, 8)
    bound = 1.0 / math.sqrt(d_model)

    def lin(kw, kb):
        w = jax.random.uniform(kw, (d_model, d_model), jnp.float32, -bound, bound)
        b = jax.random.uniform(kb, (1, d_model), jnp.float32, -bound, bound)
        return w.T, b  # store W^T so y = x @ W^T + b

    wqT, bq = lin(keys[0], keys[1])
    wkT, bk = lin(keys[2], keys[3])
    wvT, bv = lin(keys[4], keys[5])
    woT, bo = lin(keys[6], keys[7])
    return dict(wqT=wqT, bq=bq, wkT=wkT, bk=bk, wvT=wvT, bv=bv, woT=woT, bo=bo)


if __name__ == "__main__":
    # Small shapes consistent with the module's forward: (batch, seq, d_model).
    batch, seq_len, d_model, n_heads = 2, 8, 32, 4

    key = jax.random.PRNGKey(0)
    kx, kp = jax.random.split(key)
    x = jax.random.normal(kx, (batch, seq_len, d_model), jnp.float32)
    params = init_params(kp, d_model)

    try:
        out = jax.block_until_ready(mh_pooling(x, params, n_heads=n_heads))
    except Exception:
        # pipeline_mode=pl.Buffered(1) single-buffering may be unsupported on
        # some jax builds; retry with default (double) buffering.
        out = jax.block_until_ready(
            mh_pooling(x, params, n_heads=n_heads, single_buffer_weights=False))

    ref = mh_pooling_reference(x, params, n_heads=n_heads)
    assert out.shape == (batch, seq_len, d_model)
    # bf16 MXU operands + approx reciprocal vs. the f32 reference -> loose tol.
    assert jnp.allclose(out, ref, atol=3e-2, rtol=3e-2), (
        "mismatch vs reference; max abs err = "
        f"{float(jnp.max(jnp.abs(out - ref)))}")

    print("KERNEL_OK")
</pallas_src>

<mosaic_0001>
module attributes {stable_mosaic.version = 11 : i64} {
  func.func @_qkv_proj_kernel(%arg0: i32, %arg1: i32, %arg2: memref<1x8x32xbf16, #tpu.memory_space<vmem>>, %arg3: memref<32x32xbf16, #tpu.memory_space<vmem>>, %arg4: memref<32x32xbf16, #tpu.memory_space<vmem>>, %arg5: memref<32x32xbf16, #tpu.memory_space<vmem>>, %arg6: memref<1x32xf32, #tpu.memory_space<vmem>>, %arg7: memref<1x32xf32, #tpu.memory_space<vmem>>, %arg8: memref<1x32xf32, #tpu.memory_space<vmem>>, %arg9: memref<1x4x8x8xbf16, #tpu.memory_space<vmem>>, %arg10: memref<1x4x8x8xbf16, #tpu.memory_space<vmem>>, %arg11: memref<1x4x8x8xbf16, #tpu.memory_space<vmem>>) attributes {dimension_semantics = [#tpu.dimension_semantics<parallel>, #tpu.dimension_semantics<parallel>], iteration_bounds = array<i64: 2, 1>, scalar_prefetch = 0 : i64, scratch_operands = 0 : i64, tpu.core_type = #tpu.core_type<tc>, window_params = [{transform_indices = @transform_0, window_bounds = array<i64: 1, 8, 32>}, {pipeline_mode = #tpu.pipeline_mode<synchronous>, transform_indices = @transform_1, window_bounds = array<i64: 32, 32>}, {pipeline_mode = #tpu.pipeline_mode<synchronous>, transform_indices = @transform_2, window_bounds = array<i64: 32, 32>}, {pipeline_mode = #tpu.pipeline_mode<synchronous>, transform_indices = @transform_3, window_bounds = array<i64: 32, 32>}, {pipeline_mode = #tpu.pipeline_mode<synchronous>, transform_indices = @transform_4, window_bounds = array<i64: 1, 32>}, {pipeline_mode = #tpu.pipeline_mode<synchronous>, transform_indices = @transform_5, window_bounds = array<i64: 1, 32>}, {pipeline_mode = #tpu.pipeline_mode<synchronous>, transform_indices = @transform_6, window_bounds = array<i64: 1, 32>}, {transform_indices = @transform_7, window_bounds = array<i64: 1, 4, 8, 8>}, {transform_indices = @transform_8, window_bounds = array<i64: 1, 4, 8, 8>}, {transform_indices = @transform_9, window_bounds = array<i64: 1, 4, 8, 8>}]} {
    %c0 = arith.constant 0 : index
    %c0_0 = arith.constant 0 : index
    %c0_1 = arith.constant 0 : index
    %0 = vector.load %arg2[%c0, %c0_0, %c0_1] : memref<1x8x32xbf16, #tpu.memory_space<vmem>>, vector<1x8x32xbf16>
    %1 = vector.shape_cast %0 : vector<1x8x32xbf16> to vector<8x32xbf16>
    %c0_2 = arith.constant 0 : index
    %c0_3 = arith.constant 0 : index
    %2 = vector.load %arg3[%c0_2, %c0_3] : memref<32x32xbf16, #tpu.memory_space<vmem>>, vector<32x32xbf16>
    %cst = arith.constant dense<0.000000e+00> : vector<8x32xf32>
    %3 = tpu.matmul %1, %2, %cst {dimension_numbers = #tpu.dot_dimension_numbers<[1], [0], [0], [1], [0, 0, 1, 1], [], []>} : vector<8x32xbf16>, vector<32x32xbf16>, vector<8x32xf32> -> vector<8x32xf32>
    %c0_4 = arith.constant 0 : index
    %c0_5 = arith.constant 0 : index
    %4 = vector.load %arg6[%c0_4, %c0_5] : memref<1x32xf32, #tpu.memory_space<vmem>>, vector<1x32xf32>
    %5 = vector.broadcast %4 : vector<1x32xf32> to vector<8x32xf32>
    %6 = arith.addf %3, %5 : vector<8x32xf32>
    %7 = vector.extract_strided_slice %6 {offsets = [0, 0], sizes = [8, 8], strides = [1, 1]} : vector<8x32xf32> to vector<8x8xf32>
    %8 = arith.truncf %7 : vector<8x8xf32> to vector<8x8xbf16>
    %c0_6 = arith.constant 0 : index
    %c0_7 = arith.constant 0 : index
    %c0_8 = arith.constant 0 : index
    %c0_9 = arith.constant 0 : index
    %9 = vector.load %arg9[%c0_6, %c0_7, %c0_8, %c0_9] : memref<1x4x8x8xbf16, #tpu.memory_space<vmem>>, vector<1x1x8x8xbf16>
    %10 = vector.shape_cast %9 : vector<1x1x8x8xbf16> to vector<8x8xbf16>
    %11 = vector.shape_cast %8 : vector<8x8xbf16> to vector<1x1x8x8xbf16>
    tpu.vector_store %arg9[%c0_6, %c0_7, %c0_8, %c0_9], %11 {strides = array<i32>} : memref<1x4x8x8xbf16, #tpu.memory_space<vmem>>, vector<1x1x8x8xbf16>,
    %12 = vector.extract_strided_slice %6 {offsets = [0, 8], sizes = [8, 8], strides = [1, 1]} : vector<8x32xf32> to vector<8x8xf32>
    %13 = arith.truncf %12 : vector<8x8xf32> to vector<8x8xbf16>
    %c0_10 = arith.constant 0 : index
    %c1 = arith.constant 1 : index
    %c0_11 = arith.constant 0 : index
    %c0_12 = arith.constant 0 : index
    %14 = vector.load %arg9[%c0_10, %c1, %c0_11, %c0_12] : memref<1x4x8x8xbf16, #tpu.memory_space<vmem>>, vector<1x1x8x8xbf16>
    %15 = vector.shape_cast %14 : vector<1x1x8x8xbf16> to vector<8x8xbf16>
    %16 = vector.shape_cast %13 : vector<8x8xbf16> to vector<1x1x8x8xbf16>
    tpu.vector_store %arg9[%c0_10, %c1, %c0_11, %c0_12], %16 {strides = array<i32>} : memref<1x4x8x8xbf16, #tpu.memory_space<vmem>>, vector<1x1x8x8xbf16>,
    %17 = vector.extract_strided_slice %6 {offsets = [0, 16], sizes = [8, 8], strides = [1, 1]} : vector<8x32xf32> to vector<8x8xf32>
    %18 = arith.truncf %17 : vector<8x8xf32> to vector<8x8xbf16>
    %c0_13 = arith.constant 0 : index
    %c2 = arith.constant 2 : index
    %c0_14 = arith.constant 0 : index
    %c0_15 = arith.constant 0 : index
    %19 = vector.load %arg9[%c0_13, %c2, %c0_14, %c0_15] : memref<1x4x8x8xbf16, #tpu.memory_space<vmem>>, vector<1x1x8x8xbf16>
    %20 = vector.shape_cast %19 : vector<1x1x8x8xbf16> to vector<8x8xbf16>
    %21 = vector.shape_cast %18 : vector<8x8xbf16> to vector<1x1x8x8xbf16>
    tpu.vector_store %arg9[%c0_13, %c2, %c0_14, %c0_15], %21 {strides = array<i32>} : memref<1x4x8x8xbf16, #tpu.memory_space<vmem>>, vector<1x1x8x8xbf16>,
    %22 = vector.extract_strided_slice %6 {offsets = [0, 24], sizes = [8, 8], strides = [1, 1]} : vector<8x32xf32> to vector<8x8xf32>
    %23 = arith.truncf %22 : vector<8x8xf32> to vector<8x8xbf16>
    %c0_16 = arith.constant 0 : index
    %c3 = arith.constant 3 : index
    %c0_17 = arith.constant 0 : index
    %c0_18 = arith.constant 0 : index
    %24 = vector.load %arg9[%c0_16, %c3, %c0_17, %c0_18] : memref<1x4x8x8xbf16, #tpu.memory_space<vmem>>, vector<1x1x8x8xbf16>
    %25 = vector.shape_cast %24 : vector<1x1x8x8xbf16> to vector<8x8xbf16>
    %26 = vector.shape_cast %23 : vector<8x8xbf16> to vector<1x1x8x8xbf16>
    tpu.vector_store %arg9[%c0_16, %c3, %c0_17, %c0_18], %26 {strides = array<i32>} : memref<1x4x8x8xbf16, #tpu.memory_space<vmem>>, vector<1x1x8x8xbf16>,
    %c0_19 = arith.constant 0 : index
    %c0_20 = arith.constant 0 : index
    %27 = vector.load %arg4[%c0_19, %c0_20] : memref<32x32xbf16, #tpu.memory_space<vmem>>, vector<32x32xbf16>
    %cst_21 = arith.constant dense<0.000000e+00> : vector<8x32xf32>
    %28 = tpu.matmul %1, %27, %cst_21 {dimension_numbers = #tpu.dot_dimension_numbers<[1], [0], [0], [1], [0, 0, 1, 1], [], []>} : vector<8x32xbf16>, vector<32x32xbf16>, vector<8x32xf32> -> vector<8x32xf32>
    %c0_22 = arith.constant 0 : index
    %c0_23 = arith.constant 0 : index
    %29 = vector.load %arg7[%c0_22, %c0_23] : memref<1x32xf32, #tpu.memory_space<vmem>>, vector<1x32xf32>
    %30 = vector.broadcast %29 : vector<1x32xf32> to vector<8x32xf32>
    %31 = arith.addf %28, %30 : vector<8x32xf32>
    %32 = vector.extract_strided_slice %31 {offsets = [0, 0], sizes = [8, 8], strides = [1, 1]} : vector<8x32xf32> to vector<8x8xf32>
    %33 = arith.truncf %32 : vector<8x8xf32> to vector<8x8xbf16>
    %c0_24 = arith.constant 0 : index
    %c0_25 = arith.constant 0 : index
    %c0_26 = arith.constant 0 : index
    %c0_27 = arith.constant 0 : index
    %34 = vector.load %arg10[%c0_24, %c0_25, %c0_26, %c0_27] : memref<1x4x8x8xbf16, #tpu.memory_space<vmem>>, vector<1x1x8x8xbf16>
    %35 = vector.shape_cast %34 : vector<1x1x8x8xbf16> to vector<8x8xbf16>
    %36 = vector.shape_cast %33 : vector<8x8xbf16> to vector<1x1x8x8xbf16>
    tpu.vector_store %arg10[%c0_24, %c0_25, %c0_26, %c0_27], %36 {strides = array<i32>} : memref<1x4x8x8xbf16, #tpu.memory_space<vmem>>, vector<1x1x8x8xbf16>,
    %37 = vector.extract_strided_slice %31 {offsets = [0, 8], sizes = [8, 8], strides = [1, 1]} : vector<8x32xf32> to vector<8x8xf32>
    %38 = arith.truncf %37 : vector<8x8xf32> to vector<8x8xbf16>
    %c0_28 = arith.constant 0 : index
    %c1_29 = arith.constant 1 : index
    %c0_30 = arith.constant 0 : index
    %c0_31 = arith.constant 0 : index
    %39 = vector.load %arg10[%c0_28, %c1_29, %c0_30, %c0_31] : memref<1x4x8x8xbf16, #tpu.memory_space<vmem>>, vector<1x1x8x8xbf16>
    %40 = vector.shape_cast %39 : vector<1x1x8x8xbf16> to vector<8x8xbf16>
    %41 = vector.shape_cast %38 : vector<8x8xbf16> to vector<1x1x8x8xbf16>
    tpu.vector_store %arg10[%c0_28, %c1_29, %c0_30, %c0_31], %41 {strides = array<i32>} : memref<1x4x8x8xbf16, #tpu.memory_space<vmem>>, vector<1x1x8x8xbf16>,
    %42 = vector.extract_strided_slice %31 {offsets = [0, 16], sizes = [8, 8], strides = [1, 1]} : vector<8x32xf32> to vector<8x8xf32>
    %43 = arith.truncf %42 : vector<8x8xf32> to vector<8x8xbf16>
    %c0_32 = arith.constant 0 : index
    %c2_33 = arith.constant 2 : index
    %c0_34 = arith.constant 0 : index
    %c0_35 = arith.constant 0 : index
    %44 = vector.load %arg10[%c0_32, %c2_33, %c0_34, %c0_35] : memref<1x4x8x8xbf16, #tpu.memory_space<vmem>>, vector<1x1x8x8xbf16>
    %45 = vector.shape_cast %44 : vector<1x1x8x8xbf16> to vector<8x8xbf16>
    %46 = vector.shape_cast %43 : vector<8x8xbf16> to vector<1x1x8x8xbf16>
    tpu.vector_store %arg10[%c0_32, %c2_33, %c0_34, %c0_35], %46 {strides = array<i32>} : memref<1x4x8x8xbf16, #tpu.memory_space<vmem>>, vector<1x1x8x8xbf16>,
    %47 = vector.extract_strided_slice %31 {offsets = [0, 24], sizes = [8, 8], strides = [1, 1]} : vector<8x32xf32> to vector<8x8xf32>
    %48 = arith.truncf %47 : vector<8x8xf32> to vector<8x8xbf16>
    %c0_36 = arith.constant 0 : index
    %c3_37 = arith.constant 3 : index
    %c0_38 = arith.constant 0 : index
    %c0_39 = arith.constant 0 : index
    %49 = vector.load %arg10[%c0_36, %c3_37, %c0_38, %c0_39] : memref<1x4x8x8xbf16, #tpu.memory_space<vmem>>, vector<1x1x8x8xbf16>
    %50 = vector.shape_cast %49 : vector<1x1x8x8xbf16> to vector<8x8xbf16>
    %51 = vector.shape_cast %48 : vector<8x8xbf16> to vector<1x1x8x8xbf16>
    tpu.vector_store %arg10[%c0_36, %c3_37, %c0_38, %c0_39], %51 {strides = array<i32>} : memref<1x4x8x8xbf16, #tpu.memory_space<vmem>>, vector<1x1x8x8xbf16>,
    %c0_40 = arith.constant 0 : index
    %c0_41 = arith.constant 0 : index
    %52 = vector.load %arg5[%c0_40, %c0_41] : memref<32x32xbf16, #tpu.memory_space<vmem>>, vector<32x32xbf16>
    %cst_42 = arith.constant dense<0.000000e+00> : vector<8x32xf32>
    %53 = tpu.matmul %1, %52, %cst_42 {dimension_numbers = #tpu.dot_dimension_numbers<[1], [0], [0], [1], [0, 0, 1, 1], [], []>} : vector<8x32xbf16>, vector<32x32xbf16>, vector<8x32xf32> -> vector<8x32xf32>
    %c0_43 = arith.constant 0 : index
    %c0_44 = arith.constant 0 : index
    %54 = vector.load %arg8[%c0_43, %c0_44] : memref<1x32xf32, #tpu.memory_space<vmem>>, vector<1x32xf32>
    %55 = vector.broadcast %54 : vector<1x32xf32> to vector<8x32xf32>
    %56 = arith.addf %53, %55 : vector<8x32xf32>
    %57 = vector.extract_strided_slice %56 {offsets = [0, 0], sizes = [8, 8], strides = [1, 1]} : vector<8x32xf32> to vector<8x8xf32>
    %58 = arith.truncf %57 : vector<8x8xf32> to vector<8x8xbf16>
    %c0_45 = arith.constant 0 : index
    %c0_46 = arith.constant 0 : index
    %c0_47 = arith.constant 0 : index
    %c0_48 = arith.constant 0 : index
    %59 = vector.load %arg11[%c0_45, %c0_46, %c0_47, %c0_48] : memref<1x4x8x8xbf16, #tpu.memory_space<vmem>>, vector<1x1x8x8xbf16>
    %60 = vector.shape_cast %59 : vector<1x1x8x8xbf16> to vector<8x8xbf16>
    %61 = vector.shape_cast %58 : vector<8x8xbf16> to vector<1x1x8x8xbf16>
    tpu.vector_store %arg11[%c0_45, %c0_46, %c0_47, %c0_48], %61 {strides = array<i32>} : memref<1x4x8x8xbf16, #tpu.memory_space<vmem>>, vector<1x1x8x8xbf16>,
    %62 = vector.extract_strided_slice %56 {offsets = [0, 8], sizes = [8, 8], strides = [1, 1]} : vector<8x32xf32> to vector<8x8xf32>
    %63 = arith.truncf %62 : vector<8x8xf32> to vector<8x8xbf16>
    %c0_49 = arith.constant 0 : index
    %c1_50 = arith.constant 1 : index
    %c0_51 = arith.constant 0 : index
    %c0_52 = arith.constant 0 : index
    %64 = vector.load %arg11[%c0_49, %c1_50, %c0_51, %c0_52] : memref<1x4x8x8xbf16, #tpu.memory_space<vmem>>, vector<1x1x8x8xbf16>
    %65 = vector.shape_cast %64 : vector<1x1x8x8xbf16> to vector<8x8xbf16>
    %66 = vector.shape_cast %63 : vector<8x8xbf16> to vector<1x1x8x8xbf16>
    tpu.vector_store %arg11[%c0_49, %c1_50, %c0_51, %c0_52], %66 {strides = array<i32>} : memref<1x4x8x8xbf16, #tpu.memory_space<vmem>>, vector<1x1x8x8xbf16>,
    %67 = vector.extract_strided_slice %56 {offsets = [0, 16], sizes = [8, 8], strides = [1, 1]} : vector<8x32xf32> to vector<8x8xf32>
    %68 = arith.truncf %67 : vector<8x8xf32> to vector<8x8xbf16>
    %c0_53 = arith.constant 0 : index
    %c2_54 = arith.constant 2 : index
    %c0_55 = arith.constant 0 : index
    %c0_56 = arith.constant 0 : index
    %69 = vector.load %arg11[%c0_53, %c2_54, %c0_55, %c0_56] : memref<1x4x8x8xbf16, #tpu.memory_space<vmem>>, vector<1x1x8x8xbf16>
    %70 = vector.shape_cast %69 : vector<1x1x8x8xbf16> to vector<8x8xbf16>
    %71 = vector.shape_cast %68 : vector<8x8xbf16> to vector<1x1x8x8xbf16>
    tpu.vector_store %arg11[%c0_53, %c2_54, %c0_55, %c0_56], %71 {strides = array<i32>} : memref<1x4x8x8xbf16, #tpu.memory_space<vmem>>, vector<1x1x8x8xbf16>,
    %72 = vector.extract_strided_slice %56 {offsets = [0, 24], sizes = [8, 8], strides = [1, 1]} : vector<8x32xf32> to vector<8x8xf32>
    %73 = arith.truncf %72 : vector<8x8xf32> to vector<8x8xbf16>
    %c0_57 = arith.constant 0 : index
    %c3_58 = arith.constant 3 : index
    %c0_59 = arith.constant 0 : index
    %c0_60 = arith.constant 0 : index
    %74 = vector.load %arg11[%c0_57, %c3_58, %c0_59, %c0_60] : memref<1x4x8x8xbf16, #tpu.memory_space<vmem>>, vector<1x1x8x8xbf16>
    %75 = vector.shape_cast %74 : vector<1x1x8x8xbf16> to vector<8x8xbf16>
    %76 = vector.shape_cast %73 : vector<8x8xbf16> to vector<1x1x8x8xbf16>
    tpu.vector_store %arg11[%c0_57, %c3_58, %c0_59, %c0_60], %76 {strides = array<i32>} : memref<1x4x8x8xbf16, #tpu.memory_space<vmem>>, vector<1x1x8x8xbf16>,
    return
  }
  func.func @transform_0(%arg0: i32, %arg1: i32) -> (i32, i32, i32) {
    %c0_i32 = arith.constant 0 : i32
    %c0_i32_0 = arith.constant 0 : i32
    return %arg0, %arg1, %c0_i32 : i32, i32, i32
  }
  func.func @transform_1(%arg0: i32, %arg1: i32) -> (i32, i32) {
    %c0_i32 = arith.constant 0 : i32
    %c0_i32_0 = arith.constant 0 : i32
    %c0_i32_1 = arith.constant 0 : i32
    return %c0_i32, %c0_i32_0 : i32, i32
  }
  func.func @transform_2(%arg0: i32, %arg1: i32) -> (i32, i32) {
    %c0_i32 = arith.constant 0 : i32
    %c0_i32_0 = arith.constant 0 : i32
    %c0_i32_1 = arith.constant 0 : i32
    return %c0_i32, %c0_i32_0 : i32, i32
  }
  func.func @transform_3(%arg0: i32, %arg1: i32) -> (i32, i32) {
    %c0_i32 = arith.constant 0 : i32
    %c0_i32_0 = arith.constant 0 : i32
    %c0_i32_1 = arith.constant 0 : i32
    return %c0_i32, %c0_i32_0 : i32, i32
  }
  func.func @transform_4(%arg0: i32, %arg1: i32) -> (i32, i32) {
    %c0_i32 = arith.constant 0 : i32
    %c0_i32_0 = arith.constant 0 : i32
    %c0_i32_1 = arith.constant 0 : i32
    return %c0_i32, %c0_i32_0 : i32, i32
  }
  func.func @transform_5(%arg0: i32, %arg1: i32) -> (i32, i32) {
    %c0_i32 = arith.constant 0 : i32
    %c0_i32_0 = arith.constant 0 : i32
    %c0_i32_1 = arith.constant 0 : i32
    return %c0_i32, %c0_i32_0 : i32, i32
  }
  func.func @transform_6(%arg0: i32, %arg1: i32) -> (i32, i32) {
    %c0_i32 = arith.constant 0 : i32
    %c0_i32_0 = arith.constant 0 : i32
    %c0_i32_1 = arith.constant 0 : i32
    return %c0_i32, %c0_i32_0 : i32, i32
  }
  func.func @transform_7(%arg0: i32, %arg1: i32) -> (i32, i32, i32, i32) {
    %c0_i32 = arith.constant 0 : i32
    %c0_i32_0 = arith.constant 0 : i32
    %c0_i32_1 = arith.constant 0 : i32
    return %arg0, %c0_i32, %arg1, %c0_i32_0 : i32, i32, i32, i32
  }
  func.func @transform_8(%arg0: i32, %arg1: i32) -> (i32, i32, i32, i32) {
    %c0_i32 = arith.constant 0 : i32
    %c0_i32_0 = arith.constant 0 : i32
    %c0_i32_1 = arith.constant 0 : i32
    return %arg0, %c0_i32, %arg1, %c0_i32_0 : i32, i32, i32, i32
  }
  func.func @transform_9(%arg0: i32, %arg1: i32) -> (i32, i32, i32, i32) {
    %c0_i32 = arith.constant 0 : i32
    %c0_i32_0 = arith.constant 0 : i32
    %c0_i32_1 = arith.constant 0 : i32
    return %arg0, %c0_i32, %arg1, %c0_i32_0 : i32, i32, i32, i32
  }
}

module attributes {stable_mosaic.version = 11 : i64} {
  func.func @_qkv_proj_kernel(%arg0: i32, %arg1: i32, %arg2: memref<1x8x32xbf16, #tpu.memory_space<vmem>>, %arg3: memref<32x32xbf16, #tpu.memory_space<vmem>>, %arg4: memref<32x32xbf16, #tpu.memory_space<vmem>>, %arg5: memref<32x32xbf16, #tpu.memory_space<vmem>>, %arg6: memref<1x32xf32, #tpu.memory_space<vmem>>, %arg7: memref<1x32xf32, #tpu.memory_space<vmem>>, %arg8: memref<1x32xf32, #tpu.memory_space<vmem>>, %arg9: memref<1x4x8x8xbf16, #tpu.memory_space<vmem>>, %arg10: memref<1x4x8x8xbf16, #tpu.memory_space<vmem>>, %arg11: memref<1x4x8x8xbf16, #tpu.memory_space<vmem>>) attributes {dimension_semantics = [#tpu.dimension_semantics<parallel>, #tpu.dimension_semantics<parallel>], iteration_bounds = array<i64: 2, 1>, scalar_prefetch = 0 : i64, scratch_operands = 0 : i64, tpu.core_type = #tpu.core_type<tc>, window_params = [{transform_indices = @transform_0, window_bounds = array<i64: 1, 8, 32>}, {pipeline_mode = #tpu.pipeline_mode<synchronous>, transform_indices = @transform_1, window_bounds = array<i64: 32, 32>}, {pipeline_mode = #tpu.pipeline_mode<synchronous>, transform_indices = @transform_2, window_bounds = array<i64: 32, 32>}, {pipeline_mode = #tpu.pipeline_mode<synchronous>, transform_indices = @transform_3, window_bounds = array<i64: 32, 32>}, {pipeline_mode = #tpu.pipeline_mode<synchronous>, transform_indices = @transform_4, window_bounds = array<i64: 1, 32>}, {pipeline_mode = #tpu.pipeline_mode<synchronous>, transform_indices = @transform_5, window_bounds = array<i64: 1, 32>}, {pipeline_mode = #tpu.pipeline_mode<synchronous>, transform_indices = @transform_6, window_bounds = array<i64: 1, 32>}, {transform_indices = @transform_7, window_bounds = array<i64: 1, 4, 8, 8>}, {transform_indices = @transform_8, window_bounds = array<i64: 1, 4, 8, 8>}, {transform_indices = @transform_9, window_bounds = array<i64: 1, 4, 8, 8>}]} {
    %c0 = arith.constant 0 : index
    %c0_0 = arith.constant 0 : index
    %c0_1 = arith.constant 0 : index
    %0 = vector.load %arg2[%c0, %c0_0, %c0_1] : memref<1x8x32xbf16, #tpu.memory_space<vmem>>, vector<1x8x32xbf16>
    %1 = vector.shape_cast %0 : vector<1x8x32xbf16> to vector<8x32xbf16>
    %c0_2 = arith.constant 0 : index
    %c0_3 = arith.constant 0 : index
    %2 = vector.load %arg3[%c0_2, %c0_3] : memref<32x32xbf16, #tpu.memory_space<vmem>>, vector<32x32xbf16>
    %cst = arith.constant dense<0.000000e+00> : vector<8x32xf32>
    %3 = tpu.matmul %1, %2, %cst {dimension_numbers = #tpu.dot_dimension_numbers<[1], [0], [0], [1], [0, 0, 1, 1], [], []>} : vector<8x32xbf16>, vector<32x32xbf16>, vector<8x32xf32> -> vector<8x32xf32>
    %c0_4 = arith.constant 0 : index
    %c0_5 = arith.constant 0 : index
    %4 = vector.load %arg6[%c0_4, %c0_5] : memref<1x32xf32, #tpu.memory_space<vmem>>, vector<1x32xf32>
    %5 = vector.broadcast %4 : vector<1x32xf32> to vector<8x32xf32>
    %6 = arith.addf %3, %5 : vector<8x32xf32>
    %7 = vector.extract_strided_slice %6 {offsets = [0, 0], sizes = [8, 8], strides = [1, 1]} : vector<8x32xf32> to vector<8x8xf32>
    %8 = arith.truncf %7 : vector<8x8xf32> to vector<8x8xbf16>
    %c0_6 = arith.constant 0 : index
    %c0_7 = arith.constant 0 : index
    %c0_8 = arith.constant 0 : index
    %c0_9 = arith.constant 0 : index
    %9 = vector.load %arg9[%c0_6, %c0_7, %c0_8, %c0_9] : memref<1x4x8x8xbf16, #tpu.memory_space<vmem>>, vector<1x1x8x8xbf16>
    %10 = vector.shape_cast %9 : vector<1x1x8x8xbf16> to vector<8x8xbf16>
    %11 = vector.shape_cast %8 : vector<8x8xbf16> to vector<1x1x8x8xbf16>
    tpu.vector_store %arg9[%c0_6, %c0_7, %c0_8, %c0_9], %11 {strides = array<i32>} : memref<1x4x8x8xbf16, #tpu.memory_space<vmem>>, vector<1x1x8x8xbf16>,
    %12 = vector.extract_strided_slice %6 {offsets = [0, 8], sizes = [8, 8], strides = [1, 1]} : vector<8x32xf32> to vector<8x8xf32>
    %13 = arith.truncf %12 : vector<8x8xf32> to vector<8x8xbf16>
    %c0_10 = arith.constant 0 : index
    %c1 = arith.constant 1 : index
    %c0_11 = arith.constant 0 : index
    %c0_12 = arith.constant 0 : index
    %14 = vector.load %arg9[%c0_10, %c1, %c0_11, %c0_12] : memref<1x4x8x8xbf16, #tpu.memory_space<vmem>>, vector<1x1x8x8xbf16>
    %15 = vector.shape_cast %14 : vector<1x1x8x8xbf16> to vector<8x8xbf16>
    %16 = vector.shape_cast %13 : vector<8x8xbf16> to vector<1x1x8x8xbf16>
    tpu.vector_store %arg9[%c0_10, %c1, %c0_11, %c0_12], %16 {strides = array<i32>} : memref<1x4x8x8xbf16, #tpu.memory_space<vmem>>, vector<1x1x8x8xbf16>,
    %17 = vector.extract_strided_slice %6 {offsets = [0, 16], sizes = [8, 8], strides = [1, 1]} : vector<8x32xf32> to vector<8x8xf32>
    %18 = arith.truncf %17 : vector<8x8xf32> to vector<8x8xbf16>
    %c0_13 = arith.constant 0 : index
    %c2 = arith.constant 2 : index
    %c0_14 = arith.constant 0 : index
    %c0_15 = arith.constant 0 : index
    %19 = vector.load %arg9[%c0_13, %c2, %c0_14, %c0_15] : memref<1x4x8x8xbf16, #tpu.memory_space<vmem>>, vector<1x1x8x8xbf16>
    %20 = vector.shape_cast %19 : vector<1x1x8x8xbf16> to vector<8x8xbf16>
    %21 = vector.shape_cast %18 : vector<8x8xbf16> to vector<1x1x8x8xbf16>
    tpu.vector_store %arg9[%c0_13, %c2, %c0_14, %c0_15], %21 {strides = array<i32>} : memref<1x4x8x8xbf16, #tpu.memory_space<vmem>>, vector<1x1x8x8xbf16>,
    %22 = vector.extract_strided_slice %6 {offsets = [0, 24], sizes = [8, 8], strides = [1, 1]} : vector<8x32xf32> to vector<8x8xf32>
    %23 = arith.truncf %22 : vector<8x8xf32> to vector<8x8xbf16>
    %c0_16 = arith.constant 0 : index
    %c3 = arith.constant 3 : index
    %c0_17 = arith.constant 0 : index
    %c0_18 = arith.constant 0 : index
    %24 = vector.load %arg9[%c0_16, %c3, %c0_17, %c0_18] : memref<1x4x8x8xbf16, #tpu.memory_space<vmem>>, vector<1x1x8x8xbf16>
    %25 = vector.shape_cast %24 : vector<1x1x8x8xbf16> to vector<8x8xbf16>
    %26 = vector.shape_cast %23 : vector<8x8xbf16> to vector<1x1x8x8xbf16>
    tpu.vector_store %arg9[%c0_16, %c3, %c0_17, %c0_18], %26 {strides = array<i32>} : memref<1x4x8x8xbf16, #tpu.memory_space<vmem>>, vector<1x1x8x8xbf16>,
    %c0_19 = arith.constant 0 : index
    %c0_20 = arith.constant 0 : index
    %27 = vector.load %arg4[%c0_19, %c0_20] : memref<32x32xbf16, #tpu.memory_space<vmem>>, vector<32x32xbf16>
    %cst_21 = arith.constant dense<0.000000e+00> : vector<8x32xf32>
    %28 = tpu.matmul %1, %27, %cst_21 {dimension_numbers = #tpu.dot_dimension_numbers<[1], [0], [0], [1], [0, 0, 1, 1], [], []>} : vector<8x32xbf16>, vector<32x32xbf16>, vector<8x32xf32> -> vector<8x32xf32>
    %c0_22 = arith.constant 0 : index
    %c0_23 = arith.constant 0 : index
    %29 = vector.load %arg7[%c0_22, %c0_23] : memref<1x32xf32, #tpu.memory_space<vmem>>, vector<1x32xf32>
    %30 = vector.broadcast %29 : vector<1x32xf32> to vector<8x32xf32>
    %31 = arith.addf %28, %30 : vector<8x32xf32>
    %32 = vector.extract_strided_slice %31 {offsets = [0, 0], sizes = [8, 8], strides = [1, 1]} : vector<8x32xf32> to vector<8x8xf32>
    %33 = arith.truncf %32 : vector<8x8xf32> to vector<8x8xbf16>
    %c0_24 = arith.constant 0 : index
    %c0_25 = arith.constant 0 : index
    %c0_26 = arith.constant 0 : index
    %c0_27 = arith.constant 0 : index
    %34 = vector.load %arg10[%c0_24, %c0_25, %c0_26, %c0_27] : memref<1x4x8x8xbf16, #tpu.memory_space<vmem>>, vector<1x1x8x8xbf16>
    %35 = vector.shape_cast %34 : vector<1x1x8x8xbf16> to vector<8x8xbf16>
    %36 = vector.shape_cast %33 : vector<8x8xbf16> to vector<1x1x8x8xbf16>
    tpu.vector_store %arg10[%c0_24, %c0_25, %c0_26, %c0_27], %36 {strides = array<i32>} : memref<1x4x8x8xbf16, #tpu.memory_space<vmem>>, vector<1x1x8x8xbf16>,
    %37 = vector.extract_strided_slice %31 {offsets = [0, 8], sizes = [8, 8], strides = [1, 1]} : vector<8x32xf32> to vector<8x8xf32>
    %38 = arith.truncf %37 : vector<8x8xf32> to vector<8x8xbf16>
    %c0_28 = arith.constant 0 : index
    %c1_29 = arith.constant 1 : index
    %c0_30 = arith.constant 0 : index
    %c0_31 = arith.constant 0 : index
    %39 = vector.load %arg10[%c0_28, %c1_29, %c0_30, %c0_31] : memref<1x4x8x8xbf16, #tpu.memory_space<vmem>>, vector<1x1x8x8xbf16>
    %40 = vector.shape_cast %39 : vector<1x1x8x8xbf16> to vector<8x8xbf16>
    %41 = vector.shape_cast %38 : vector<8x8xbf16> to vector<1x1x8x8xbf16>
    tpu.vector_store %arg10[%c0_28, %c1_29, %c0_30, %c0_31], %41 {strides = array<i32>} : memref<1x4x8x8xbf16, #tpu.memory_space<vmem>>, vector<1x1x8x8xbf16>,
    %42 = vector.extract_strided_slice %31 {offsets = [0, 16], sizes = [8, 8], strides = [1, 1]} : vector<8x32xf32> to vector<8x8xf32>
    %43 = arith.truncf %42 : vector<8x8xf32> to vector<8x8xbf16>
    %c0_32 = arith.constant 0 : index
    %c2_33 = arith.constant 2 : index
    %c0_34 = arith.constant 0 : index
    %c0_35 = arith.constant 0 : index
    %44 = vector.load %arg10[%c0_32, %c2_33, %c0_34, %c0_35] : memref<1x4x8x8xbf16, #tpu.memory_space<vmem>>, vector<1x1x8x8xbf16>
    %45 = vector.shape_cast %44 : vector<1x1x8x8xbf16> to vector<8x8xbf16>
    %46 = vector.shape_cast %43 : vector<8x8xbf16> to vector<1x1x8x8xbf16>
    tpu.vector_store %arg10[%c0_32, %c2_33, %c0_34, %c0_35], %46 {strides = array<i32>} : memref<1x4x8x8xbf16, #tpu.memory_space<vmem>>, vector<1x1x8x8xbf16>,
    %47 = vector.extract_strided_slice %31 {offsets = [0, 24], sizes = [8, 8], strides = [1, 1]} : vector<8x32xf32> to vector<8x8xf32>
    %48 = arith.truncf %47 : vector<8x8xf32> to vector<8x8xbf16>
    %c0_36 = arith.constant 0 : index
    %c3_37 = arith.constant 3 : index
    %c0_38 = arith.constant 0 : index
    %c0_39 = arith.constant 0 : index
    %49 = vector.load %arg10[%c0_36, %c3_37, %c0_38, %c0_39] : memref<1x4x8x8xbf16, #tpu.memory_space<vmem>>, vector<1x1x8x8xbf16>
    %50 = vector.shape_cast %49 : vector<1x1x8x8xbf16> to vector<8x8xbf16>
    %51 = vector.shape_cast %48 : vector<8x8xbf16> to vector<1x1x8x8xbf16>
    tpu.vector_store %arg10[%c0_36, %c3_37, %c0_38, %c0_39], %51 {strides = array<i32>} : memref<1x4x8x8xbf16, #tpu.memory_space<vmem>>, vector<1x1x8x8xbf16>,
    %c0_40 = arith.constant 0 : index
    %c0_41 = arith.constant 0 : index
    %52 = vector.load %arg5[%c0_40, %c0_41] : memref<32x32xbf16, #tpu.memory_space<vmem>>, vector<32x32xbf16>
    %cst_42 = arith.constant dense<0.000000e+00> : vector<8x32xf32>
    %53 = tpu.matmul %1, %52, %cst_42 {dimension_numbers = #tpu.dot_dimension_numbers<[1], [0], [0], [1], [0, 0, 1, 1], [], []>} : vector<8x32xbf16>, vector<32x32xbf16>, vector<8x32xf32> -> vector<8x32xf32>
    %c0_43 = arith.constant 0 : index
    %c0_44 = arith.constant 0 : index
    %54 = vector.load %arg8[%c0_43, %c0_44] : memref<1x32xf32, #tpu.memory_space<vmem>>, vector<1x32xf32>
    %55 = vector.broadcast %54 : vector<1x32xf32> to vector<8x32xf32>
    %56 = arith.addf %53, %55 : vector<8x32xf32>
    %57 = vector.extract_strided_slice %56 {offsets = [0, 0], sizes = [8, 8], strides = [1, 1]} : vector<8x32xf32> to vector<8x8xf32>
    %58 = arith.truncf %57 : vector<8x8xf32> to vector<8x8xbf16>
    %c0_45 = arith.constant 0 : index
    %c0_46 = arith.constant 0 : index
    %c0_47 = arith.constant 0 : index
    %c0_48 = arith.constant 0 : index
    %59 = vector.load %arg11[%c0_45, %c0_46, %c0_47, %c0_48] : memref<1x4x8x8xbf16, #tpu.memory_space<vmem>>, vector<1x1x8x8xbf16>
    %60 = vector.shape_cast %59 : vector<1x1x8x8xbf16> to vector<8x8xbf16>
    %61 = vector.shape_cast %58 : vector<8x8xbf16> to vector<1x1x8x8xbf16>
    tpu.vector_store %arg11[%c0_45, %c0_46, %c0_47, %c0_48], %61 {strides = array<i32>} : memref<1x4x8x8xbf16, #tpu.memory_space<vmem>>, vector<1x1x8x8xbf16>,
    %62 = vector.extract_strided_slice %56 {offsets = [0, 8], sizes = [8, 8], strides = [1, 1]} : vector<8x32xf32> to vector<8x8xf32>
    %63 = arith.truncf %62 : vector<8x8xf32> to vector<8x8xbf16>
    %c0_49 = arith.constant 0 : index
    %c1_50 = arith.constant 1 : index
    %c0_51 = arith.constant 0 : index
    %c0_52 = arith.constant 0 : index
    %64 = vector.load %arg11[%c0_49, %c1_50, %c0_51, %c0_52] : memref<1x4x8x8xbf16, #tpu.memory_space<vmem>>, vector<1x1x8x8xbf16>
    %65 = vector.shape_cast %64 : vector<1x1x8x8xbf16> to vector<8x8xbf16>
    %66 = vector.shape_cast %63 : vector<8x8xbf16> to vector<1x1x8x8xbf16>
    tpu.vector_store %arg11[%c0_49, %c1_50, %c0_51, %c0_52], %66 {strides = array<i32>} : memref<1x4x8x8xbf16, #tpu.memory_space<vmem>>, vector<1x1x8x8xbf16>,
    %67 = vector.extract_strided_slice %56 {offsets = [0, 16], sizes = [8, 8], strides = [1, 1]} : vector<8x32xf32> to vector<8x8xf32>
    %68 = arith.truncf %67 : vector<8x8xf32> to vector<8x8xbf16>
    %c0_53 = arith.constant 0 : index
    %c2_54 = arith.constant 2 : index
    %c0_55 = arith.constant 0 : index
    %c0_56 = arith.constant 0 : index
    %69 = vector.load %arg11[%c0_53, %c2_54, %c0_55, %c0_56] : memref<1x4x8x8xbf16, #tpu.memory_space<vmem>>, vector<1x1x8x8xbf16>
    %70 = vector.shape_cast %69 : vector<1x1x8x8xbf16> to vector<8x8xbf16>
    %71 = vector.shape_cast %68 : vector<8x8xbf16> to vector<1x1x8x8xbf16>
    tpu.vector_store %arg11[%c0_53, %c2_54, %c0_55, %c0_56], %71 {strides = array<i32>} : memref<1x4x8x8xbf16, #tpu.memory_space<vmem>>, vector<1x1x8x8xbf16>,
    %72 = vector.extract_strided_slice %56 {offsets = [0, 24], sizes = [8, 8], strides = [1, 1]} : vector<8x32xf32> to vector<8x8xf32>
    %73 = arith.truncf %72 : vector<8x8xf32> to vector<8x8xbf16>
    %c0_57 = arith.constant 0 : index
    %c3_58 = arith.constant 3 : index
    %c0_59 = arith.constant 0 : index
    %c0_60 = arith.constant 0 : index
    %74 = vector.load %arg11[%c0_57, %c3_58, %c0_59, %c0_60] : memref<1x4x8x8xbf16, #tpu.memory_space<vmem>>, vector<1x1x8x8xbf16>
    %75 = vector.shape_cast %74 : vector<1x1x8x8xbf16> to vector<8x8xbf16>
    %76 = vector.shape_cast %73 : vector<8x8xbf16> to vector<1x1x8x8xbf16>
    tpu.vector_store %arg11[%c0_57, %c3_58, %c0_59, %c0_60], %76 {strides = array<i32>} : memref<1x4x8x8xbf16, #tpu.memory_space<vmem>>, vector<1x1x8x8xbf16>,
    return
  }
  func.func @transform_0(%arg0: i32, %arg1: i32) -> (i32, i32, i32) {
    %c0_i32 = arith.constant 0 : i32
    %c0_i32_0 = arith.constant 0 : i32
    return %arg0, %arg1, %c0_i32 : i32, i32, i32
  }
  func.func @transform_1(%arg0: i32, %arg1: i32) -> (i32, i32) {
    %c0_i32 = arith.constant 0 : i32
    %c0_i32_0 = arith.constant 0 : i32
    %c0_i32_1 = arith.constant 0 : i32
    return %c0_i32, %c0_i32_0 : i32, i32
  }
  func.func @transform_2(%arg0: i32, %arg1: i32) -> (i32, i32) {
    %c0_i32 = arith.constant 0 : i32
    %c0_i32_0 = arith.constant 0 : i32
    %c0_i32_1 = arith.constant 0 : i32
    return %c0_i32, %c0_i32_0 : i32, i32
  }
  func.func @transform_3(%arg0: i32, %arg1: i32) -> (i32, i32) {
    %c0_i32 = arith.constant 0 : i32
    %c0_i32_0 = arith.constant 0 : i32
    %c0_i32_1 = arith.constant 0 : i32
    return %c0_i32, %c0_i32_0 : i32, i32
  }
  func.func @transform_4(%arg0: i32, %arg1: i32) -> (i32, i32) {
    %c0_i32 = arith.constant 0 : i32
    %c0_i32_0 = arith.constant 0 : i32
    %c0_i32_1 = arith.constant 0 : i32
    return %c0_i32, %c0_i32_0 : i32, i32
  }
  func.func @transform_5(%arg0: i32, %arg1: i32) -> (i32, i32) {
    %c0_i32 = arith.constant 0 : i32
    %c0_i32_0 = arith.constant 0 : i32
    %c0_i32_1 = arith.constant 0 : i32
    return %c0_i32, %c0_i32_0 : i32, i32
  }
  func.func @transform_6(%arg0: i32, %arg1: i32) -> (i32, i32) {
    %c0_i32 = arith.constant 0 : i32
    %c0_i32_0 = arith.constant 0 : i32
    %c0_i32_1 = arith.constant 0 : i32
    return %c0_i32, %c0_i32_0 : i32, i32
  }
  func.func @transform_7(%arg0: i32, %arg1: i32) -> (i32, i32, i32, i32) {
    %c0_i32 = arith.constant 0 : i32
    %c0_i32_0 = arith.constant 0 : i32
    %c0_i32_1 = arith.constant 0 : i32
    return %arg0, %c0_i32, %arg1, %c0_i32_0 : i32, i32, i32, i32
  }
  func.func @transform_8(%arg0: i32, %arg1: i32) -> (i32, i32, i32, i32) {
    %c0_i32 = arith.constant 0 : i32
    %c0_i32_0 = arith.constant 0 : i32
    %c0_i32_1 = arith.constant 0 : i32
    return %arg0, %c0_i32, %arg1, %c0_i32_0 : i32, i32, i32, i32
  }
  func.func @transform_9(%arg0: i32, %arg1: i32) -> (i32, i32, i32, i32) {
    %c0_i32 = arith.constant 0 : i32
    %c0_i32_0 = arith.constant 0 : i32
    %c0_i32_1 = arith.constant 0 : i32
    return %arg0, %c0_i32, %arg1, %c0_i32_0 : i32, i32, i32, i32
  }
}

</mosaic_0001>

<llo_original>
// kernel: tpu_custom_call.1
$region0: #{tpu_custom_call.1}
  #allocation0 [shape = 'u32[]', space=smem, size = 0x4, offset = 0x4, fixed_abs, tag = 'smem constant byte address 0x4 - core index']
  #allocation1 [shape = 'u32[144,128]{1,0:T(1,128)}', space=vmem, size = 0x12000, scoped, tag = 'internal scratch']
  %s0 = inlined_call_operand.hbm [shape: bf16[2,8,32], index: 0, kind: input, shape index: {}]
  %s1 = inlined_call_operand.hbm [shape: bf16[32,32], index: 1, kind: input, shape index: {}]
  %s2 = inlined_call_operand.hbm [shape: bf16[32,32], index: 2, kind: input, shape index: {}]
  %s3 = inlined_call_operand.hbm [shape: bf16[32,32], index: 3, kind: input, shape index: {}]
  %s4 = inlined_call_operand.vmem [shape: f32[1,32], index: 4, kind: input, shape index: {}]
  %s5 = inlined_call_operand.vmem [shape: f32[1,32], index: 5, kind: input, shape index: {}]
  %s6 = inlined_call_operand.vmem [shape: f32[1,32], index: 6, kind: input, shape index: {}]
  %s7 = inlined_call_operand.hbm [shape: bf16[2,4,8,8], index: 7, kind: output, shape index: {0}]
  %s8 = inlined_call_operand.hbm [shape: bf16[2,4,8,8], index: 8, kind: output, shape index: {1}]
  %s9 = inlined_call_operand.hbm [shape: bf16[2,4,8,8], index: 9, kind: output, shape index: {2}]
  %10 = xla_tuple %s7, %s8, %s9
  %s11 = sld [smem:[#allocation0]]
  $region93: #{tpu_custom_call.1} parent=0
    _
  %s13 = ssub.s32 1, %s11
  %s14 = scalar_select 0, %s13, %s11
  $region1: #{tpu_custom_call.1} parent=0
    #allocation2 [shape = 'u8[4096]{0}', space=vmem, size = 0x1000, scoped, tag = 'input window, operand 0']
    #allocation3 [shape = 's32[2]{0}', space=sflag, size = 0x8, scoped, tag = 'scoped memory for tpu_custom_call.1']
    #allocation4 [shape = 's32[2]{0}', space=sflag, size = 0x8, scoped, tag = 'scoped memory for tpu_custom_call.1']
    #allocation5 [shape = 'u8[8192]{0}', space=vmem, size = 0x2000, scoped, tag = 'input window, operand 1, single buffered']
    #allocation6 [shape = 's32[1]{0}', space=sflag, size = 0x4, scoped, tag = 'scoped memory for tpu_custom_call.1']
    #allocation7 [shape = 'u8[8192]{0}', space=vmem, size = 0x2000, scoped, tag = 'input window, operand 2, single buffered']
    #allocation8 [shape = 'u8[8192]{0}', space=vmem, size = 0x2000, scoped, tag = 'input window, operand 3, single buffered']
    #allocation9 [shape = 's32[1]{0}', space=sflag, size = 0x4, scoped, tag = 'scoped memory for tpu_custom_call.1']
    #allocation10 [shape = 'u8[16384]{0}', space=vmem, size = 0x4000, scoped, tag = 'output window, operand 0']
    #allocation11 [shape = 'u8[16384]{0}', space=vmem, size = 0x4000, scoped, tag = 'output window, operand 1']
    #allocation12 [shape = 's32[2]{0}', space=sflag, size = 0x8, scoped, tag = 'scoped memory for tpu_custom_call.1']
    #allocation13 [shape = 'u8[16384]{0}', space=vmem, size = 0x4000, scoped, tag = 'output window, operand 2']
    %15 = vsyncpa [#allocation3], 0
    %s16 = scalar_lea.sflag [#allocation3], 1
    %17 = vsyncpa %s16, 0
    %18 = vsyncpa [#allocation6], 0
    %19 = vsyncpa [#allocation9], 0
    %20 = vsyncpa [#allocation4], 0
    %s21 = scalar_lea.sflag [#allocation4], 1
    %22 = vsyncpa %s21, 0
    %23 = vsyncpa [#allocation12], 0
    %s24 = scalar_lea.sflag [#allocation12], 1
    %25 = vsyncpa %s24, 0
    loop: start=0, step=1, limit=4
    $region2: #{tpu_custom_call.1} parent=1 // loop_pre_header
      _
    $region3: #{tpu_custom_call.1} parent=1 // loop_header
      %s27 = sphi 0, %s31
      %p28 = scmp.ge.s32.totalorder %s27, 4
      %s34 = sphi 0, %s46
      %s35 = sphi 0, %s42
      %s36 = sphi 0, %s34
      %s37 = sphi 0, %s35
      %s38 = sphi 0, %s36
      %s39 = sphi 0, %s37
      %s51 = sphi 0, %s53
      %s54 = sphi 0, %s51
      %s55 = sphi 0, %s54
      %s71 = sphi 0, %s55
      %s75 = sphi 0, %s75
      %s77 = sphi 0, %s75
      %s78 = sphi 0, %s77
      %s92 = sphi 0, %s78
      %s96 = sphi 0, %s96
      %s98 = sphi 0, %s96
      %s99 = sphi 0, %s98
      %s113 = sphi 0, %s99
      %s117 = sphi 0, %s117
      %s119 = sphi 0, %s117
      %s120 = sphi 0, %s119
      %s134 = sphi 0, %s120
      %s138 = sphi 0, %s138
      %s140 = sphi 0, %s138
      %s141 = sphi 0, %s140
      %s155 = sphi 0, %s141
      %s159 = sphi 0, %s159
      %s161 = sphi 0, %s159
      %s162 = sphi 0, %s161
      %s176 = sphi 0, %s162
      %s180 = sphi 0, %s180
      %s182 = sphi 0, %s180
      %s183 = sphi 0, %s182
      %s197 = sphi 0, %s183
      %s205 = sphi 0, %s207
      %s208 = sphi 0, %s205
      %s209 = sphi 0, %s208
      %s225 = sphi 0, %s209
      %s233 = sphi 0, %s235
      %s236 = sphi 0, %s233
      %s237 = sphi 0, %s236
      %s253 = sphi 0, %s237
      %s261 = sphi 0, %s263
      %s264 = sphi 0, %s261
      %s265 = sphi 0, %s264
      %s281 = sphi 0, %s265
    $region4: #{tpu_custom_call.1} parent=1 // loop_header_branch
      %30 = sbr.rel (%p28) target = $region8
    $region5: #{tpu_custom_call.1} parent=1 // loop_body
      %s32 = ssub.s32 %s27, 1
      %s33 = ssub.s32 %s27, 2
      %s40 = sadd.s32 1, %s35
      %p41 = scmp.ge.s32.totalorder %s40, 1
      %s42 = scalar_select %p41, 0, %s40
      %s43 = sadd.s32 1, %s34
      %s44 = scalar_select %p41, %s43, %s34
      %p45 = scmp.ge.s32.totalorder %s44, 2
      %s46 = scalar_select %p45, 0, %s44
      %s47 = ssub.s32 %s34, %s46
      %s48 = ssub.s32 %s35, %s42
      %s49 = sor.u32 %s47, %s48
      %p50 = scmp.eq.s32.totalorder %s49, 0
      %s52 = sadd.s32 %s51, 1
      %s53 = scalar_select %p50, %s51, %s52
      %p56 = pneg %p50
      %p57 = scmp.eq.s32.totalorder %s27, 1
      %p58 = por %p56, %p57
      %p59 = scmp.ne.s32.totalorder %s51, %s54
      %p60 = scmp.eq.s32.totalorder %s27, 0
      %p61 = por %p59, %p60
      %p62 = scmp.ne.s32.totalorder %s51, %s54
      %p63 = scmp.eq.s32.totalorder %s32, 1
      %p64 = por %p62, %p63
      %p65 = scmp.ne.s32.totalorder %s54, %s55
      %p66 = scmp.eq.s32.totalorder %s32, 0
      %p67 = por %p65, %p66
      %p68 = scmp.ne.s32.totalorder %s54, %s55
      %p69 = scmp.eq.s32.totalorder %s33, 1
      %p70 = por %p68, %p69
      %p72 = scmp.ne.s32.totalorder %s55, %s71
      %p73 = scmp.eq.s32.totalorder %s33, 0
      %p74 = por %p72, %p73
      %s76 = sadd.s32 %s75, 1
      %p79 = scmp.eq.s32.totalorder %s27, 1
      %p80 = scmp.ne.s32.totalorder %s75, %s77
      %p81 = scmp.eq.s32.totalorder %s27, 0
      %p82 = por %p80, %p81
      %p83 = scmp.ne.s32.totalorder %s75, %s77
      %p84 = scmp.eq.s32.totalorder %s32, 1
      %p85 = por %p83, %p84
      %p86 = scmp.ne.s32.totalorder %s77, %s78
      %p87 = scmp.eq.s32.totalorder %s32, 0
      %p88 = por %p86, %p87
      %p89 = scmp.ne.s32.totalorder %s77, %s78
      %p90 = scmp.eq.s32.totalorder %s33, 1
      %p91 = por %p89, %p90
      %p93 = scmp.ne.s32.totalorder %s78, %s92
      %p94 = scmp.eq.s32.totalorder %s33, 0
      %p95 = por %p93, %p94
      %s97 = sadd.s32 %s96, 1
      %p100 = scmp.eq.s32.totalorder %s27, 1
      %p101 = scmp.ne.s32.totalorder %s96, %s98
      %p102 = scmp.eq.s32.totalorder %s27, 0
      %p103 = por %p101, %p102
      %p104 = scmp.ne.s32.totalorder %s96, %s98
      %p105 = scmp.eq.s32.totalorder %s32, 1
      %p106 = por %p104, %p105
      %p107 = scmp.ne.s32.totalorder %s98, %s99
      %p108 = scmp.eq.s32.totalorder %s32, 0
      %p109 = por %p107, %p108
      %p110 = scmp.ne.s32.totalorder %s98, %s99
      %p111 = scmp.eq.s32.totalorder %s33, 1
      %p112 = por %p110, %p111
      %p114 = scmp.ne.s32.totalorder %s99, %s113
      %p115 = scmp.eq.s32.totalorder %s33, 0
      %p116 = por %p114, %p115
      %s118 = sadd.s32 %s117, 1
      %p121 = scmp.eq.s32.totalorder %s27, 1
      %p122 = scmp.ne.s32.totalorder %s117, %s119
      %p123 = scmp.eq.s32.totalorder %s27, 0
      %p124 = por %p122, %p123
      %p125 = scmp.ne.s32.totalorder %s117, %s119
      %p126 = scmp.eq.s32.totalorder %s32, 1
      %p127 = por %p125, %p126
      %p128 = scmp.ne.s32.totalorder %s119, %s120
      %p129 = scmp.eq.s32.totalorder %s32, 0
      %p130 = por %p128, %p129
      %p131 = scmp.ne.s32.totalorder %s119, %s120
      %p132 = scmp.eq.s32.totalorder %s33, 1
      %p133 = por %p131, %p132
      %p135 = scmp.ne.s32.totalorder %s120, %s134
      %p136 = scmp.eq.s32.totalorder %s33, 0
      %p137 = por %p135, %p136
      %s139 = sadd.s32 %s138, 1
      %p142 = scmp.eq.s32.totalorder %s27, 1
      %p143 = scmp.ne.s32.totalorder %s138, %s140
      %p144 = scmp.eq.s32.totalorder %s27, 0
      %p145 = por %p143, %p144
      %p146 = scmp.ne.s32.totalorder %s138, %s140
      %p147 = scmp.eq.s32.totalorder %s32, 1
      %p148 = por %p146, %p147
      %p149 = scmp.ne.s32.totalorder %s140, %s141
      %p150 = scmp.eq.s32.totalorder %s32, 0
      %p151 = por %p149, %p150
      %p152 = scmp.ne.s32.totalorder %s140, %s141
      %p153 = scmp.eq.s32.totalorder %s33, 1
      %p154 = por %p152, %p153
      %p156 = scmp.ne.s32.totalorder %s141, %s155
      %p157 = scmp.eq.s32.totalorder %s33, 0
      %p158 = por %p156, %p157
      %s160 = sadd.s32 %s159, 1
      %p163 = scmp.eq.s32.totalorder %s27, 1
      %p164 = scmp.ne.s32.totalorder %s159, %s161
      %p165 = scmp.eq.s32.totalorder %s27, 0
      %p166 = por %p164, %p165
      %p167 = scmp.ne.s32.totalorder %s159, %s161
      %p168 = scmp.eq.s32.totalorder %s32, 1
      %p169 = por %p167, %p168
      %p170 = scmp.ne.s32.totalorder %s161, %s162
      %p171 = scmp.eq.s32.totalorder %s32, 0
      %p172 = por %p170, %p171
      %p173 = scmp.ne.s32.totalorder %s161, %s162
      %p174 = scmp.eq.s32.totalorder %s33, 1
      %p175 = por %p173, %p174
      %p177 = scmp.ne.s32.totalorder %s162, %s176
      %p178 = scmp.eq.s32.totalorder %s33, 0
      %p179 = por %p177, %p178
      %s181 = sadd.s32 %s180, 1
      %p184 = scmp.eq.s32.totalorder %s27, 1
      %p185 = scmp.ne.s32.totalorder %s180, %s182
      %p186 = scmp.eq.s32.totalorder %s27, 0
      %p187 = por %p185, %p186
      %p188 = scmp.ne.s32.totalorder %s180, %s182
      %p189 = scmp.eq.s32.totalorder %s32, 1
      %p190 = por %p188, %p189
      %p191 = scmp.ne.s32.totalorder %s182, %s183
      %p192 = scmp.eq.s32.totalorder %s32, 0
      %p193 = por %p191, %p192
      %p194 = scmp.ne.s32.totalorder %s182, %s183
      %p195 = scmp.eq.s32.totalorder %s33, 1
      %p196 = por %p194, %p195
      %p198 = scmp.ne.s32.totalorder %s183, %s197
      %p199 = scmp.eq.s32.totalorder %s33, 0
      %p200 = por %p198, %p199
      %s201 = ssub.s32 %s34, %s46
      %s202 = ssub.s32 %s35, %s42
      %s203 = sor.u32 %s201, %s202
      %p204 = scmp.eq.s32.totalorder %s203, 0
      %s206 = sadd.s32 %s205, 1
      %s207 = scalar_select %p204, %s205, %s206
      %p210 = pneg %p204
      %p211 = scmp.eq.s32.totalorder %s27, 1
      %p212 = por %p210, %p211
      %p213 = scmp.ne.s32.totalorder %s205, %s208
      %p214 = scmp.eq.s32.totalorder %s27, 0
      %p215 = por %p213, %p214
      %p216 = scmp.ne.s32.totalorder %s205, %s208
      %p217 = scmp.eq.s32.totalorder %s32, 1
      %p218 = por %p216, %p217
      %p219 = scmp.ne.s32.totalorder %s208, %s209
      %p220 = scmp.eq.s32.totalorder %s32, 0
      %p221 = por %p219, %p220
      %p222 = scmp.ne.s32.totalorder %s208, %s209
      %p223 = scmp.eq.s32.totalorder %s33, 1
      %p224 = por %p222, %p223
      %p226 = scmp.ne.s32.totalorder %s209, %s225
      %p227 = scmp.eq.s32.totalorder %s33, 0
      %p228 = por %p226, %p227
      %s229 = ssub.s32 %s34, %s46
      %s230 = ssub.s32 %s35, %s42
      %s231 = sor.u32 %s229, %s230
      %p232 = scmp.eq.s32.totalorder %s231, 0
      %s234 = sadd.s32 %s233, 1
      %s235 = scalar_select %p232, %s233, %s234
      %p238 = pneg %p232
      %p239 = scmp.eq.s32.totalorder %s27, 1
      %p240 = por %p238, %p239
      %p241 = scmp.ne.s32.totalorder %s233, %s236
      %p242 = scmp.eq.s32.totalorder %s27, 0
      %p243 = por %p241, %p242
      %p244 = scmp.ne.s32.totalorder %s233, %s236
      %p245 = scmp.eq.s32.totalorder %s32, 1
      %p246 = por %p244, %p245
      %p247 = scmp.ne.s32.totalorder %s236, %s237
      %p248 = scmp.eq.s32.totalorder %s32, 0
      %p249 = por %p247, %p248
      %p250 = scmp.ne.s32.totalorder %s236, %s237
      %p251 = scmp.eq.s32.totalorder %s33, 1
      %p252 = por %p250, %p251
      %p254 = scmp.ne.s32.totalorder %s237, %s253
      %p255 = scmp.eq.s32.totalorder %s33, 0
      %p256 = por %p254, %p255
      %s257 = ssub.s32 %s34, %s46
      %s258 = ssub.s32 %s35, %s42
      %s259 = sor.u32 %s257, %s258
      %p260 = scmp.eq.s32.totalorder %s259, 0
      %s262 = sadd.s32 %s261, 1
      %s263 = scalar_select %p260, %s261, %s262
      %p266 = pneg %p260
      %p267 = scmp.eq.s32.totalorder %s27, 1
      %p268 = por %p266, %p267
      %p269 = scmp.ne.s32.totalorder %s261, %s264
      %p270 = scmp.eq.s32.totalorder %s27, 0
      %p271 = por %p269, %p270
      %p272 = scmp.ne.s32.totalorder %s261, %s264
      %p273 = scmp.eq.s32.totalorder %s32, 1
      %p274 = por %p272, %p273
      %p275 = scmp.ne.s32.totalorder %s264, %s265
      %p276 = scmp.eq.s32.totalorder %s32, 0
      %p277 = por %p275, %p276
      %p278 = scmp.ne.s32.totalorder %s264, %s265
      %p279 = scmp.eq.s32.totalorder %s33, 1
      %p280 = por %p278, %p279
      %p282 = scmp.ne.s32.totalorder %s265, %s281
      %p283 = scmp.eq.s32.totalorder %s33, 0
      %p284 = por %p282, %p283
      %p285 = scmp.le.s32.totalorder 1, %s27
      %p286 = scmp.lt.s32.totalorder %s27, 3
      %p287 = pnand %p285, %p286
      %p288 = pneg %p287
      // Predicated region
      $region9: #{tpu_custom_call.1} parent=5 // pred_check
        _
      $region10: #{tpu_custom_call.1} parent=5 // pred_check_branch
        %290 = sbr.rel (%p287) target = $region12
      $region11: #{tpu_custom_call.1} parent=5 // pred_region
        %s291 = ssub.s32 %s27, 1
        // Predicated region
        $region13: #{tpu_custom_call.1} parent=11 // pred_check
          %p292 = pneg %p88
        $region14: #{tpu_custom_call.1} parent=11 // pred_check_branch
          %294 = sbr.rel (%p292) target = $region16
        $region15: #{tpu_custom_call.1} parent=11 // pred_region
          %s296 = ssub.s32 256, 256
          %297 = vsyncadd [#allocation6], %s296
          %s298 = sshll.u32 [#allocation5], 4
          %s299 = int_to_ptr.vmem [resolvable:$true] %s298
          %304 = dma.hbm_to_vmem [thread:$0]  %s1, 256, %s299, [#allocation6], 64, 64, 4
        $region16: #{tpu_custom_call.1} parent=11 // pred_fallthru
          _
        // Predicated region
        $region17: #{tpu_custom_call.1} parent=11 // pred_check
          %p305 = pneg %p109
        $region18: #{tpu_custom_call.1} parent=11 // pred_check_branch
          %307 = sbr.rel (%p305) target = $region20
        $region19: #{tpu_custom_call.1} parent=11 // pred_region
          %s309 = ssub.s32 256, 256
          %310 = vsyncadd [#allocation6], %s309
          %s311 = sshll.u32 [#allocation7], 4
          %s312 = int_to_ptr.vmem [resolvable:$true] %s311
          %317 = dma.hbm_to_vmem [thread:$0]  %s2, 256, %s312, [#allocation6], 64, 64, 4
        $region20: #{tpu_custom_call.1} parent=11 // pred_fallthru
          _
        // Predicated region
        $region21: #{tpu_custom_call.1} parent=11 // pred_check
          %p318 = pneg %p130
        $region22: #{tpu_custom_call.1} parent=11 // pred_check_branch
          %320 = sbr.rel (%p318) target = $region24
        $region23: #{tpu_custom_call.1} parent=11 // pred_region
          %s322 = ssub.s32 256, 256
          %323 = vsyncadd [#allocation9], %s322
          %s324 = sshll.u32 [#allocation8], 4
          %s325 = int_to_ptr.vmem [resolvable:$true] %s324
          %330 = dma.hbm_to_vmem [thread:$0]  %s3, 256, %s325, [#allocation9], 64, 64, 4
        $region24: #{tpu_custom_call.1} parent=11 // pred_fallthru
          _
        // Predicated region
        $region25: #{tpu_custom_call.1} parent=11 // pred_check
          %p331 = pneg %p151
        $region26: #{tpu_custom_call.1} parent=11 // pred_check_branch
          %333 = sbr.rel (%p331) target = $region28
        $region27: #{tpu_custom_call.1} parent=11 // pred_region
          _
        $region28: #{tpu_custom_call.1} parent=11 // pred_fallthru
          _
        // Predicated region
        $region29: #{tpu_custom_call.1} parent=11 // pred_check
          %p334 = pneg %p172
        $region30: #{tpu_custom_call.1} parent=11 // pred_check_branch
          %336 = sbr.rel (%p334) target = $region32
        $region31: #{tpu_custom_call.1} parent=11 // pred_region
          _
        $region32: #{tpu_custom_call.1} parent=11 // pred_fallthru
          _
        // Predicated region
        $region33: #{tpu_custom_call.1} parent=11 // pred_check
          %p337 = pneg %p193
        $region34: #{tpu_custom_call.1} parent=11 // pred_check_branch
          %339 = sbr.rel (%p337) target = $region36
        $region35: #{tpu_custom_call.1} parent=11 // pred_region
          _
        $region36: #{tpu_custom_call.1} parent=11 // pred_fallthru
          _
      $region12: #{tpu_custom_call.1} parent=5 // pred_fallthru
        _
      %p340 = scmp.lt.s32.totalorder %s27, 2
      // Predicated region
      $region37: #{tpu_custom_call.1} parent=5 // pred_check
        %p341 = pneg %p340
      $region38: #{tpu_custom_call.1} parent=5 // pred_check_branch
        %343 = sbr.rel (%p341) target = $region40
      $region39: #{tpu_custom_call.1} parent=5 // pred_region
        // Predicated region
        $region41: #{tpu_custom_call.1} parent=39 // pred_check
          %p344 = pneg %p61
        $region42: #{tpu_custom_call.1} parent=39 // pred_check_branch
          %346 = sbr.rel (%p344) target = $region44
        $region43: #{tpu_custom_call.1} parent=39 // pred_region
          %s347 = sand.u32 %s51, 1
          %s348 = scalar_lea.sflag [#allocation3], %s347
          %s349 = sand.u32 %s51, 1
          %s350 = smul.addr %s349, 4
          %s351 = scalar_lea.vmem [#allocation2], %s350
          %s353 = ssub.s32 64, 64
          %354 = vsyncadd %s348, %s353
          %s355 = sadd.s32 %s35, %s34
          %s356 = smul.addr %s355, 64
          %s357 = scalar_lea.hbm %s0, %s356
          %s359 = sshll.u32 %s351, 4
          %s360 = int_to_ptr.vmem [resolvable:$true] %s359
          %362 = dma.hbm_to_vmem [thread:$0]  %s357, 64, %s360, %s348
        $region44: #{tpu_custom_call.1} parent=39 // pred_fallthru
          _
      $region40: #{tpu_custom_call.1} parent=5 // pred_fallthru
        _
      %p363 = scmp.le.s32.totalorder 1, %s27
      %p364 = scmp.lt.s32.totalorder %s27, 3
      %p365 = pnand %p363, %p364
      %p366 = pneg %p365
      // Predicated region
      $region45: #{tpu_custom_call.1} parent=5 // pred_check
        _
      $region46: #{tpu_custom_call.1} parent=5 // pred_check_branch
        %368 = sbr.rel (%p365) target = $region48
      $region47: #{tpu_custom_call.1} parent=5 // pred_region
        %s369 = ssub.s32 %s27, 1
        %s370 = sand.u32 %s54, 1
        %s371 = scalar_lea.sflag [#allocation3], %s370
        %s372 = sand.u32 %s54, 1
        %s373 = smul.addr %s372, 4
        %s374 = scalar_lea.vmem [#allocation2], %s373
        // Predicated region
        $region49: #{tpu_custom_call.1} parent=47 // pred_check
          %p375 = pneg %p67
        $region50: #{tpu_custom_call.1} parent=47 // pred_check_branch
          %377 = sbr.rel (%p375) target = $region52
        $region51: #{tpu_custom_call.1} parent=47 // pred_region
          %378 = dma.done %s371, 64
        $region52: #{tpu_custom_call.1} parent=47 // pred_fallthru
          _
        // Predicated region
        $region53: #{tpu_custom_call.1} parent=47 // pred_check
          %p379 = pneg %p88
        $region54: #{tpu_custom_call.1} parent=47 // pred_check_branch
          %381 = sbr.rel (%p379) target = $region56
        $region55: #{tpu_custom_call.1} parent=47 // pred_region
          %382 = dma.done [#allocation6], 256
        $region56: #{tpu_custom_call.1} parent=47 // pred_fallthru
          _
        // Predicated region
        $region57: #{tpu_custom_call.1} parent=47 // pred_check
          %p383 = pneg %p109
        $region58: #{tpu_custom_call.1} parent=47 // pred_check_branch
          %385 = sbr.rel (%p383) target = $region60
        $region59: #{tpu_custom_call.1} parent=47 // pred_region
          %386 = dma.done [#allocation6], 256
        $region60: #{tpu_custom_call.1} parent=47 // pred_fallthru
          _
        // Predicated region
        $region61: #{tpu_custom_call.1} parent=47 // pred_check
          %p387 = pneg %p130
        $region62: #{tpu_custom_call.1} parent=47 // pred_check_branch
          %389 = sbr.rel (%p387) target = $region64
        $region63: #{tpu_custom_call.1} parent=47 // pred_region
          %390 = dma.done [#allocation9], 256
        $region64: #{tpu_custom_call.1} parent=47 // pred_fallthru
          _
        %s391 = sand.u32 %s54, 1
        %s392 = scalar_lea.sflag [#allocation3], %s391
        %s393 = sand.u32 %s54, 1
        %s394 = smul.addr %s393, 4
        %s395 = scalar_lea.vmem [#allocation2], %s394
        %p396 = pneg %p67
        %p397 = pneg %p64
        %p398 = pneg %p88
        %p399 = pneg %p85
        %p400 = pneg %p109
        %p401 = pneg %p106
        %p402 = pneg %p130
        %p403 = pneg %p127
        %p404 = pneg %p151
        %p405 = pneg %p148
        %p406 = pneg %p172
        %p407 = pneg %p169
        %p408 = pneg %p193
        %p409 = pneg %p190
        %p410 = pneg %p221
        %p411 = pneg %p218
        %s412 = sand.u32 %s208, 1
        %s413 = scalar_lea.sflag [#allocation4], %s412
        %s414 = sand.u32 %s208, 1
        %s415 = smul.addr %s414, 16
        %s416 = scalar_lea.vmem [#allocation10], %s415
        %p417 = pneg %p249
        %p418 = pneg %p246
        %s419 = sand.u32 %s32, 1
        %s420 = scalar_lea.sflag [#allocation12], %s419
        %s421 = sand.u32 %s236, 1
        %s422 = smul.addr %s421, 16
        %s423 = scalar_lea.vmem [#allocation11], %s422
        %p424 = pneg %p277
        %p425 = pneg %p274
        %s426 = sand.u32 %s32, 1
        %s427 = scalar_lea.sflag [#allocation12], %s426
        %s428 = sand.u32 %s264, 1
        %s429 = smul.addr %s428, 16
        %s430 = scalar_lea.vmem [#allocation13], %s429
        %v432 = vld [vmem:[%s374] sm:$0xf]
        %v433 = vld [vmem:[#allocation5] sm:$0xf]
        %v434 = vld [vmem:[#allocation5 + $0x4] sm:$0xf]
        %v435 = vld [vmem:[#allocation5 + $0x8] sm:$0xf]
        %v436 = vld [vmem:[#allocation5 + $0xc] sm:$0xf]
        %v437 = vld [vmem:[%s4] sm:$0x1]
        %v439 = vlaneseq
        %v440 = vshrl.u32 %v439, 7
        %v441 = vsub.s32 0, %v440
        %v442 = vrot.slane %v437, %v441
        %v448 = vunpack.c.l.b16 %v433
        %v449 = vunpack.c.l.b16 %v434
        %v450 = vunpack.c.l.b16 %v435
        %v451 = vunpack.c.l.b16 %v436
        %v452 = vpack.c.b16 %v449, %v448
        %v453 = vpack.c.b16 %v451, %v450
        %vm456 = vcmask 261120
        %v458 = vsel %vm456, %v432, 0
        %460 = vmatprep.subr.bf16.mxu0 0
        %461 = vmatpush1.bf16.msra.mxu0 0
        %462 = vmatprep.subr.bf16.mxu0 0
        %463 = vmatpush1.bf16.msra.mxu0 0
        %464 = vmatprep.subr.bf16.mxu0 0
        %465 = vmatpush1.bf16.msra.mxu0 0
        %466 = vmatprep.subr.bf16.mxu0 0
        %467 = vmatpush1.bf16.msra.mxu0 0
        %468 = vmatprep.subr.bf16.mxu0 0
        %469 = vmatpush1.bf16.msra.mxu0 0
        %470 = vmatprep.subr.bf16.mxu0 0
        %471 = vmatpush1.bf16.msra.mxu0 0
        %472 = vmatprep.subr.bf16.mxu0 0
        %473 = vmatpush1.bf16.msra.mxu0 %v453
        %474 = vmatprep.subr.bf16.mxu0 0
        %475 = vmatpush1.bf16.msra.mxu0 %v452
        %476 = vmatprep.subr.bf16.mxu0 0
        %477 = vmatpush2.bf16.msra.mxu0 0
        %478 = vmatprep.subr.bf16.mxu0 0
        %479 = vmatpush2.bf16.msra.mxu0 0
        %480 = vmatprep.subr.bf16.mxu0 0
        %481 = vmatpush2.bf16.msra.mxu0 0
        %482 = vmatprep.subr.bf16.mxu0 0
        %483 = vmatpush2.bf16.msra.mxu0 0
        %484 = vmatprep.subr.bf16.mxu0 0
        %485 = vmatpush2.bf16.msra.mxu0 0
        %486 = vmatprep.subr.bf16.mxu0 0
        %487 = vmatpush2.bf16.msra.mxu0 0
        %488 = vmatprep.subr.bf16.mxu0 0
        %489 = vmatpush2.bf16.msra.mxu0 0
        %490 = vmatprep.subr.bf16.mxu0 0
        %491 = vmatpush2.bf16.msra.mxu0 0
        %492 = vmatprep.mubr.bf16.mxu0 0
        %493 = vmatmul.mubr.bf16.gmra.mxu0 %v458
        %v494 = vpop.f32.mrf.mxu0
        %v495 = vadd.f32 %v442, %v494
        %v496 = vpop.f32.mrf.mxu0
        %v497 = vpop.f32.mrf.mxu0
        %v498 = vpop.f32.mrf.mxu0
        %499 = vdwg.mxu0
        %v500 = vpack.c.bf16 %v495, %v495
        %vm501 = vcmask 60416
        %502 = vst.msk [vmem:[%s416] sm:$0xf] %vm501, %v500
        %v504 = vunpack.c.l.b16 %v500
        %v505 = vpack.c.b16 %v504, %v504
        %506 = vrot.lane.b32.xlu0 %v505, 120
        %v507 = vpop.permute.xlu0 %506
        %s509 = scalar_lea.vmem %s416, 4 [#allocation10]
        %510 = vst.msk [vmem:[%s509] sm:$0xf] %vm501, %v507
        %511 = vrot.lane.b32.xlu0 %v505, 112
        %v512 = vpop.permute.xlu0 %511
        %s514 = scalar_lea.vmem %s416, 8 [#allocation10]
        %515 = vst.msk [vmem:[%s514] sm:$0xf] %vm501, %v512
        %516 = vrot.lane.b32.xlu0 %v505, 104
        %v517 = vpop.permute.xlu0 %516
        %s519 = scalar_lea.vmem %s416, 12 [#allocation10]
        %520 = vst.msk [vmem:[%s519] sm:$0xf] %vm501, %v517
        %v521 = vld [vmem:[#allocation7] sm:$0xf]
        %v522 = vld [vmem:[#allocation7 + $0x4] sm:$0xf]
        %v523 = vld [vmem:[#allocation7 + $0x8] sm:$0xf]
        %v524 = vld [vmem:[#allocation7 + $0xc] sm:$0xf]
        %v525 = vld [vmem:[%s5] sm:$0x1]
        %v527 = vlaneseq
        %v528 = vshrl.u32 %v527, 7
        %v529 = vsub.s32 0, %v528
        %v530 = vrot.slane %v525, %v529
        %v536 = vunpack.c.l.b16 %v521
        %v537 = vunpack.c.l.b16 %v522
        %v538 = vunpack.c.l.b16 %v523
        %v539 = vunpack.c.l.b16 %v524
        %v540 = vpack.c.b16 %v537, %v536
        %v541 = vpack.c.b16 %v539, %v538
        %544 = vmatprep.subr.bf16.mxu0 0
        %545 = vmatpush1.bf16.msra.mxu0 0
        %546 = vmatprep.subr.bf16.mxu0 0
        %547 = vmatpush1.bf16.msra.mxu0 0
        %548 = vmatprep.subr.bf16.mxu0 0
        %549 = vmatpush1.bf16.msra.mxu0 0
        %550 = vmatprep.subr.bf16.mxu0 0
        %551 = vmatpush1.bf16.msra.mxu0 0
        %552 = vmatprep.subr.bf16.mxu0 0
        %553 = vmatpush1.bf16.msra.mxu0 0
        %554 = vmatprep.subr.bf16.mxu0 0
        %555 = vmatpush1.bf16.msra.mxu0 0
        %556 = vmatprep.subr.bf16.mxu0 0
        %557 = vmatpush1.bf16.msra.mxu0 %v541
        %558 = vmatprep.subr.bf16.mxu0 0
        %559 = vmatpush1.bf16.msra.mxu0 %v540
        %560 = vmatprep.subr.bf16.mxu0 0
        %561 = vmatpush2.bf16.msra.mxu0 0
        %562 = vmatprep.subr.bf16.mxu0 0
        %563 = vmatpush2.bf16.msra.mxu0 0
        %564 = vmatprep.subr.bf16.mxu0 0
        %565 = vmatpush2.bf16.msra.mxu0 0
        %566 = vmatprep.subr.bf16.mxu0 0
        %567 = vmatpush2.bf16.msra.mxu0 0
        %568 = vmatprep.subr.bf16.mxu0 0
        %569 = vmatpush2.bf16.msra.mxu0 0
        %570 = vmatprep.subr.bf16.mxu0 0
        %571 = vmatpush2.bf16.msra.mxu0 0
        %572 = vmatprep.subr.bf16.mxu0 0
        %573 = vmatpush2.bf16.msra.mxu0 0
        %574 = vmatprep.subr.bf16.mxu0 0
        %575 = vmatpush2.bf16.msra.mxu0 0
        %576 = vmatprep.mubr.bf16.mxu0 0
        %577 = vmatmul.mubr.bf16.gmra.mxu0 %v458
        %v578 = vpop.f32.mrf.mxu0
        %v579 = vadd.f32 %v530, %v578
        %v580 = vpop.f32.mrf.mxu0
        %v581 = vpop.f32.mrf.mxu0
        %v582 = vpop.f32.mrf.mxu0
        %583 = vdwg.mxu0
        %v584 = vpack.c.bf16 %v579, %v579
        %585 = vst.msk [vmem:[%s423] sm:$0xf] %vm501, %v584
        %v587 = vunpack.c.l.b16 %v584
        %v588 = vpack.c.b16 %v587, %v587
        %589 = vrot.lane.b32.xlu0 %v588, 120
        %v590 = vpop.permute.xlu0 %589
        %s592 = scalar_lea.vmem %s423, 4 [#allocation11]
        %593 = vst.msk [vmem:[%s592] sm:$0xf] %vm501, %v590
        %594 = vrot.lane.b32.xlu0 %v588, 112
        %v595 = vpop.permute.xlu0 %594
        %s597 = scalar_lea.vmem %s423, 8 [#allocation11]
        %598 = vst.msk [vmem:[%s597] sm:$0xf] %vm501, %v595
        %599 = vrot.lane.b32.xlu0 %v588, 104
        %v600 = vpop.permute.xlu0 %599
        %s602 = scalar_lea.vmem %s423, 12 [#allocation11]
        %603 = vst.msk [vmem:[%s602] sm:$0xf] %vm501, %v600
        %v604 = vld [vmem:[#allocation8] sm:$0xf]
        %v605 = vld [vmem:[#allocation8 + $0x4] sm:$0xf]
        %v606 = vld [vmem:[#allocation8 + $0x8] sm:$0xf]
        %v607 = vld [vmem:[#allocation8 + $0xc] sm:$0xf]
        %v608 = vld [vmem:[%s6] sm:$0x1]
        %v610 = vlaneseq
        %v611 = vshrl.u32 %v610, 7
        %v612 = vsub.s32 0, %v611
        %v613 = vrot.slane %v608, %v612
        %v619 = vunpack.c.l.b16 %v604
        %v620 = vunpack.c.l.b16 %v605
        %v621 = vunpack.c.l.b16 %v606
        %v622 = vunpack.c.l.b16 %v607
        %v623 = vpack.c.b16 %v620, %v619
        %v624 = vpack.c.b16 %v622, %v621
        %627 = vmatprep.subr.bf16.mxu0 0
        %628 = vmatpush1.bf16.msra.mxu0 0
        %629 = vmatprep.subr.bf16.mxu0 0
        %630 = vmatpush1.bf16.msra.mxu0 0
        %631 = vmatprep.subr.bf16.mxu0 0
        %632 = vmatpush1.bf16.msra.mxu0 0
        %633 = vmatprep.subr.bf16.mxu0 0
        %634 = vmatpush1.bf16.msra.mxu0 0
        %635 = vmatprep.subr.bf16.mxu0 0
        %636 = vmatpush1.bf16.msra.mxu0 0
        %637 = vmatprep.subr.bf16.mxu0 0
        %638 = vmatpush1.bf16.msra.mxu0 0
        %639 = vmatprep.subr.bf16.mxu0 0
        %640 = vmatpush1.bf16.msra.mxu0 %v624
        %641 = vmatprep.subr.bf16.mxu0 0
        %642 = vmatpush1.bf16.msra.mxu0 %v623
        %643 = vmatprep.subr.bf16.mxu0 0
        %644 = vmatpush2.bf16.msra.mxu0 0
        %645 = vmatprep.subr.bf16.mxu0 0
        %646 = vmatpush2.bf16.msra.mxu0 0
        %647 = vmatprep.subr.bf16.mxu0 0
        %648 = vmatpush2.bf16.msra.mxu0 0
        %649 = vmatprep.subr.bf16.mxu0 0
        %650 = vmatpush2.bf16.msra.mxu0 0
        %651 = vmatprep.subr.bf16.mxu0 0
        %652 = vmatpush2.bf16.msra.mxu0 0
        %653 = vmatprep.subr.bf16.mxu0 0
        %654 = vmatpush2.bf16.msra.mxu0 0
        %655 = vmatprep.subr.bf16.mxu0 0
        %656 = vmatpush2.bf16.msra.mxu0 0
        %657 = vmatprep.subr.bf16.mxu0 0
        %658 = vmatpush2.bf16.msra.mxu0 0
        %659 = vmatprep.mubr.bf16.mxu0 0
        %660 = vmatmul.mubr.bf16.gmra.mxu0 %v458
        %v661 = vpop.f32.mrf.mxu0
        %v662 = vadd.f32 %v613, %v661
        %v663 = vpop.f32.mrf.mxu0
        %v664 = vpop.f32.mrf.mxu0
        %v665 = vpop.f32.mrf.mxu0
        %666 = vdwg.mxu0
        %v667 = vpack.c.bf16 %v662, %v662
        %668 = vst.msk [vmem:[%s430] sm:$0xf] %vm501, %v667
        %v670 = vunpack.c.l.b16 %v667
        %v671 = vpack.c.b16 %v670, %v670
        %672 = vrot.lane.b32.xlu0 %v671, 120
        %v673 = vpop.permute.xlu0 %672
        %s675 = scalar_lea.vmem %s430, 4 [#allocation13]
        %676 = vst.msk [vmem:[%s675] sm:$0xf] %vm501, %v673
        %677 = vrot.lane.b32.xlu0 %v671, 112
        %v678 = vpop.permute.xlu0 %677
        %s680 = scalar_lea.vmem %s430, 8 [#allocation13]
        %681 = vst.msk [vmem:[%s680] sm:$0xf] %vm501, %v678
        %682 = vrot.lane.b32.xlu0 %v671, 104
        %v683 = vpop.permute.xlu0 %682
        %s685 = scalar_lea.vmem %s430, 12 [#allocation13]
        %686 = vst.msk [vmem:[%s685] sm:$0xf] %vm501, %v683
        %s687 = sand.u32 %s208, 1
        %s688 = scalar_lea.sflag [#allocation4], %s687
        %s689 = sand.u32 %s208, 1
        %s690 = smul.addr %s689, 16
        %s691 = scalar_lea.vmem [#allocation10], %s690
        %s692 = sand.u32 %s32, 1
        %s693 = scalar_lea.sflag [#allocation12], %s692
        %s694 = sand.u32 %s236, 1
        %s695 = smul.addr %s694, 16
        %s696 = scalar_lea.vmem [#allocation11], %s695
        %s697 = sand.u32 %s32, 1
        %s698 = scalar_lea.sflag [#allocation12], %s697
        %s699 = sand.u32 %s264, 1
        %s700 = smul.addr %s699, 16
        %s701 = scalar_lea.vmem [#allocation13], %s700
        // Predicated region
        $region65: #{tpu_custom_call.1} parent=47 // pred_check
          %p702 = pneg %p218
        $region66: #{tpu_custom_call.1} parent=47 // pred_check_branch
          %704 = sbr.rel (%p702) target = $region68
        $region67: #{tpu_custom_call.1} parent=47 // pred_region
          %s706 = ssub.s32 256, 256
          %707 = vsyncadd %s688, %s706
          %s708 = smul.addr %s36, 4
          %s709 = sadd.s32 %s37, %s708
          %s710 = smul.addr %s709, 64
          %s711 = scalar_lea.hbm %s7, %s710
          %s712 = sshll.u32 %s691, 4
          %s713 = int_to_ptr.vmem [resolvable:$true] %s712
          %718 = dma.vmem_to_hbm [thread:$0]  %s713, 256, %s711, %s688, 64, 64, 4
        $region68: #{tpu_custom_call.1} parent=47 // pred_fallthru
          _
        // Predicated region
        $region69: #{tpu_custom_call.1} parent=47 // pred_check
          %p719 = pneg %p246
        $region70: #{tpu_custom_call.1} parent=47 // pred_check_branch
          %721 = sbr.rel (%p719) target = $region72
        $region71: #{tpu_custom_call.1} parent=47 // pred_region
          %s723 = ssub.s32 256, 256
          %724 = vsyncadd %s693, %s723
          %s725 = smul.addr %s36, 4
          %s726 = sadd.s32 %s37, %s725
          %s727 = smul.addr %s726, 64
          %s728 = scalar_lea.hbm %s8, %s727
          %s729 = sshll.u32 %s696, 4
          %s730 = int_to_ptr.vmem [resolvable:$true] %s729
          %735 = dma.vmem_to_hbm [thread:$0]  %s730, 256, %s728, %s693, 64, 64, 4
        $region72: #{tpu_custom_call.1} parent=47 // pred_fallthru
          _
        // Predicated region
        $region73: #{tpu_custom_call.1} parent=47 // pred_check
          %p736 = pneg %p274
        $region74: #{tpu_custom_call.1} parent=47 // pred_check_branch
          %738 = sbr.rel (%p736) target = $region76
        $region75: #{tpu_custom_call.1} parent=47 // pred_region
          %s740 = ssub.s32 256, 256
          %741 = vsyncadd %s698, %s740
          %s742 = smul.addr %s36, 4
          %s743 = sadd.s32 %s37, %s742
          %s744 = smul.addr %s743, 64
          %s745 = scalar_lea.hbm %s9, %s744
          %s746 = sshll.u32 %s701, 4
          %s747 = int_to_ptr.vmem [resolvable:$true] %s746
          %752 = dma.vmem_to_hbm [thread:$0]  %s747, 256, %s745, %s698, 64, 64, 4
        $region76: #{tpu_custom_call.1} parent=47 // pred_fallthru
          _
      $region48: #{tpu_custom_call.1} parent=5 // pred_fallthru
        _
      %p753 = scmp.le.s32.totalorder 2, %s27
      // Predicated region
      $region77: #{tpu_custom_call.1} parent=5 // pred_check
        %p754 = pneg %p753
      $region78: #{tpu_custom_call.1} parent=5 // pred_check_branch
        %756 = sbr.rel (%p754) target = $region80
      $region79: #{tpu_custom_call.1} parent=5 // pred_region
        %s757 = ssub.s32 %s27, 2
        // Predicated region
        $region81: #{tpu_custom_call.1} parent=79 // pred_check
          %p758 = pneg %p224
        $region82: #{tpu_custom_call.1} parent=79 // pred_check_branch
          %760 = sbr.rel (%p758) target = $region84
        $region83: #{tpu_custom_call.1} parent=79 // pred_region
          %s761 = sand.u32 %s209, 1
          %s762 = scalar_lea.sflag [#allocation4], %s761
          %s763 = sand.u32 %s209, 1
          %s764 = smul.addr %s763, 16
          %s765 = scalar_lea.vmem [#allocation10], %s764
          %766 = dma.done %s762, 256
        $region84: #{tpu_custom_call.1} parent=79 // pred_fallthru
          _
        // Predicated region
        $region85: #{tpu_custom_call.1} parent=79 // pred_check
          %p767 = pneg %p252
        $region86: #{tpu_custom_call.1} parent=79 // pred_check_branch
          %769 = sbr.rel (%p767) target = $region88
        $region87: #{tpu_custom_call.1} parent=79 // pred_region
          %s770 = sand.u32 %s33, 1
          %s771 = scalar_lea.sflag [#allocation12], %s770
          %s772 = sand.u32 %s237, 1
          %s773 = smul.addr %s772, 16
          %s774 = scalar_lea.vmem [#allocation11], %s773
          %775 = dma.done %s771, 256
        $region88: #{tpu_custom_call.1} parent=79 // pred_fallthru
          _
        // Predicated region
        $region89: #{tpu_custom_call.1} parent=79 // pred_check
          %p776 = pneg %p280
        $region90: #{tpu_custom_call.1} parent=79 // pred_check_branch
          %778 = sbr.rel (%p776) target = $region92
        $region91: #{tpu_custom_call.1} parent=79 // pred_region
          %s779 = sand.u32 %s33, 1
          %s780 = scalar_lea.sflag [#allocation12], %s779
          %s781 = sand.u32 %s265, 1
          %s782 = smul.addr %s781, 16
          %s783 = scalar_lea.vmem [#allocation13], %s782
          %784 = dma.done %s780, 256
        $region92: #{tpu_custom_call.1} parent=79 // pred_fallthru
          _
      $region80: #{tpu_custom_call.1} parent=5 // pred_fallthru
        _
    $region6: #{tpu_custom_call.1} parent=1 // loop_footer
      %s31 = sadd.s32 1, %s27
    $region7: #{tpu_custom_call.1} parent=1 // loop_footer_branch
      %26 = sbr.rel target = $region3
    $region8: #{tpu_custom_call.1} parent=1 // loop_exit
      _
    %785 = vsyncpa [#allocation3], 1
    %s786 = scalar_lea.sflag [#allocation3], 1
    %787 = vsyncpa %s786, 1
    %788 = vsyncpa [#allocation6], 1
    %789 = vsyncpa [#allocation9], 1
    %790 = vsyncpa [#allocation4], 1
    %s791 = scalar_lea.sflag [#allocation4], 1
    %792 = vsyncpa %s791, 1
    %793 = vsyncpa [#allocation12], 1
    %s794 = scalar_lea.sflag [#allocation12], 1
    %795 = vsyncpa %s794, 1

// kernel: tpu_custom_call.1
$region0: #{tpu_custom_call.1}
  #allocation0 [shape = 'u32[]', space=smem, size = 0x4, offset = 0x4, fixed_abs, tag = 'smem constant byte address 0x4 - core index']
  #allocation1 [shape = 'u32[144,128]{1,0:T(1,128)}', space=vmem, size = 0x12000, scoped, tag = 'internal scratch']
  %s0 = inlined_call_operand.hbm [shape: bf16[2,8,32], index: 0, kind: input, shape index: {}]
  %s1 = inlined_call_operand.hbm [shape: bf16[32,32], index: 1, kind: input, shape index: {}]
  %s2 = inlined_call_operand.hbm [shape: bf16[32,32], index: 2, kind: input, shape index: {}]
  %s3 = inlined_call_operand.hbm [shape: bf16[32,32], index: 3, kind: input, shape index: {}]
  %s4 = inlined_call_operand.vmem [shape: f32[1,32], index: 4, kind: input, shape index: {}]
  %s5 = inlined_call_operand.vmem [shape: f32[1,32], index: 5, kind: input, shape index: {}]
  %s6 = inlined_call_operand.vmem [shape: f32[1,32], index: 6, kind: input, shape index: {}]
  %s7 = inlined_call_operand.hbm [shape: bf16[2,4,8,8], index: 7, kind: output, shape index: {0}]
  %s8 = inlined_call_operand.hbm [shape: bf16[2,4,8,8], index: 8, kind: output, shape index: {1}]
  %s9 = inlined_call_operand.hbm [shape: bf16[2,4,8,8], index: 9, kind: output, shape index: {2}]
  %10 = xla_tuple %s7, %s8, %s9
  %s11 = sld [smem:[#allocation0]]
  $region93: #{tpu_custom_call.1} parent=0
    _
  %s13 = ssub.s32 1, %s11
  %s14 = scalar_select 0, %s13, %s11
  $region1: #{tpu_custom_call.1} parent=0
    #allocation2 [shape = 'u8[4096]{0}', space=vmem, size = 0x1000, scoped, tag = 'input window, operand 0']
    #allocation3 [shape = 's32[2]{0}', space=sflag, size = 0x8, scoped, tag = 'scoped memory for tpu_custom_call.1']
    #allocation4 [shape = 's32[2]{0}', space=sflag, size = 0x8, scoped, tag = 'scoped memory for tpu_custom_call.1']
    #allocation5 [shape = 'u8[8192]{0}', space=vmem, size = 0x2000, scoped, tag = 'input window, operand 1, single buffered']
    #allocation6 [shape = 's32[1]{0}', space=sflag, size = 0x4, scoped, tag = 'scoped memory for tpu_custom_call.1']
    #allocation7 [shape = 'u8[8192]{0}', space=vmem, size = 0x2000, scoped, tag = 'input window, operand 2, single buffered']
    #allocation8 [shape = 'u8[8192]{0}', space=vmem, size = 0x2000, scoped, tag = 'input window, operand 3, single buffered']
    #allocation9 [shape = 's32[1]{0}', space=sflag, size = 0x4, scoped, tag = 'scoped memory for tpu_custom_call.1']
    #allocation10 [shape = 'u8[16384]{0}', space=vmem, size = 0x4000, scoped, tag = 'output window, operand 0']
    #allocation11 [shape = 'u8[16384]{0}', space=vmem, size = 0x4000, scoped, tag = 'output window, operand 1']
    #allocation12 [shape = 's32[2]{0}', space=sflag, size = 0x8, scoped, tag = 'scoped memory for tpu_custom_call.1']
    #allocation13 [shape = 'u8[16384]{0}', space=vmem, size = 0x4000, scoped, tag = 'output window, operand 2']
    %15 = vsyncpa [#allocation3], 0
    %s16 = scalar_lea.sflag [#allocation3], 1
    %17 = vsyncpa %s16, 0
    %18 = vsyncpa [#allocation6], 0
    %19 = vsyncpa [#allocation9], 0
    %20 = vsyncpa [#allocation4], 0
    %s21 = scalar_lea.sflag [#allocation4], 1
    %22 = vsyncpa %s21, 0
    %23 = vsyncpa [#allocation12], 0
    %s24 = scalar_lea.sflag [#allocation12], 1
    %25 = vsyncpa %s24, 0
    loop: start=0, step=1, limit=4
    $region2: #{tpu_custom_call.1} parent=1 // loop_pre_header
      _
    $region3: #{tpu_custom_call.1} parent=1 // loop_header
      %s27 = sphi 0, %s31
      %p28 = scmp.ge.s32.totalorder %s27, 4
      %s34 = sphi 0, %s46
      %s35 = sphi 0, %s42
      %s36 = sphi 0, %s34
      %s37 = sphi 0, %s35
      %s38 = sphi 0, %s36
      %s39 = sphi 0, %s37
      %s51 = sphi 0, %s53
      %s54 = sphi 0, %s51
      %s55 = sphi 0, %s54
      %s71 = sphi 0, %s55
      %s75 = sphi 0, %s75
      %s77 = sphi 0, %s75
      %s78 = sphi 0, %s77
      %s92 = sphi 0, %s78
      %s96 = sphi 0, %s96
      %s98 = sphi 0, %s96
      %s99 = sphi 0, %s98
      %s113 = sphi 0, %s99
      %s117 = sphi 0, %s117
      %s119 = sphi 0, %s117
      %s120 = sphi 0, %s119
      %s134 = sphi 0, %s120
      %s138 = sphi 0, %s138
      %s140 = sphi 0, %s138
      %s141 = sphi 0, %s140
      %s155 = sphi 0, %s141
      %s159 = sphi 0, %s159
      %s161 = sphi 0, %s159
      %s162 = sphi 0, %s161
      %s176 = sphi 0, %s162
      %s180 = sphi 0, %s180
      %s182 = sphi 0, %s180
      %s183 = sphi 0, %s182
      %s197 = sphi 0, %s183
      %s205 = sphi 0, %s207
      %s208 = sphi 0, %s205
      %s209 = sphi 0, %s208
      %s225 = sphi 0, %s209
      %s233 = sphi 0, %s235
      %s236 = sphi 0, %s233
      %s237 = sphi 0, %s236
      %s253 = sphi 0, %s237
      %s261 = sphi 0, %s263
      %s264 = sphi 0, %s261
      %s265 = sphi 0, %s264
      %s281 = sphi 0, %s265
    $region4: #{tpu_custom_call.1} parent=1 // loop_header_branch
      %30 = sbr.rel (%p28) target = $region8
    $region5: #{tpu_custom_call.1} parent=1 // loop_body
      %s32 = ssub.s32 %s27, 1
      %s33 = ssub.s32 %s27, 2
      %s40 = sadd.s32 1, %s35
      %p41 = scmp.ge.s32.totalorder %s40, 1
      %s42 = scalar_select %p41, 0, %s40
      %s43 = sadd.s32 1, %s34
      %s44 = scalar_select %p41, %s43, %s34
      %p45 = scmp.ge.s32.totalorder %s44, 2
      %s46 = scalar_select %p45, 0, %s44
      %s47 = ssub.s32 %s34, %s46
      %s48 = ssub.s32 %s35, %s42
      %s49 = sor.u32 %s47, %s48
      %p50 = scmp.eq.s32.totalorder %s49, 0
      %s52 = sadd.s32 %s51, 1
      %s53 = scalar_select %p50, %s51, %s52
      %p56 = pneg %p50
      %p57 = scmp.eq.s32.totalorder %s27, 1
      %p58 = por %p56, %p57
      %p59 = scmp.ne.s32.totalorder %s51, %s54
      %p60 = scmp.eq.s32.totalorder %s27, 0
      %p61 = por %p59, %p60
      %p62 = scmp.ne.s32.totalorder %s51, %s54
      %p63 = scmp.eq.s32.totalorder %s32, 1
      %p64 = por %p62, %p63
      %p65 = scmp.ne.s32.totalorder %s54, %s55
      %p66 = scmp.eq.s32.totalorder %s32, 0
      %p67 = por %p65, %p66
      %p68 = scmp.ne.s32.totalorder %s54, %s55
      %p69 = scmp.eq.s32.totalorder %s33, 1
      %p70 = por %p68, %p69
      %p72 = scmp.ne.s32.totalorder %s55, %s71
      %p73 = scmp.eq.s32.totalorder %s33, 0
      %p74 = por %p72, %p73
      %s76 = sadd.s32 %s75, 1
      %p79 = scmp.eq.s32.totalorder %s27, 1
      %p80 = scmp.ne.s32.totalorder %s75, %s77
      %p81 = scmp.eq.s32.totalorder %s27, 0
      %p82 = por %p80, %p81
      %p83 = scmp.ne.s32.totalorder %s75, %s77
      %p84 = scmp.eq.s32.totalorder %s32, 1
      %p85 = por %p83, %p84
      %p86 = scmp.ne.s32.totalorder %s77, %s78
      %p87 = scmp.eq.s32.totalorder %s32, 0
      %p88 = por %p86, %p87
      %p89 = scmp.ne.s32.totalorder %s77, %s78
      %p90 = scmp.eq.s32.totalorder %s33, 1
      %p91 = por %p89, %p90
      %p93 = scmp.ne.s32.totalorder %s78, %s92
      %p94 = scmp.eq.s32.totalorder %s33, 0
      %p95 = por %p93, %p94
      %s97 = sadd.s32 %s96, 1
      %p100 = scmp.eq.s32.totalorder %s27, 1
      %p101 = scmp.ne.s32.totalorder %s96, %s98
      %p102 = scmp.eq.s32.totalorder %s27, 0
      %p103 = por %p101, %p102
      %p104 = scmp.ne.s32.totalorder %s96, %s98
      %p105 = scmp.eq.s32.totalorder %s32, 1
      %p106 = por %p104, %p105
      %p107 = scmp.ne.s32.totalorder %s98, %s99
      %p108 = scmp.eq.s32.totalorder %s32, 0
      %p109 = por %p107, %p108
      %p110 = scmp.ne.s32.totalorder %s98, %s99
      %p111 = scmp.eq.s32.totalorder %s33, 1
      %p112 = por %p110, %p111
      %p114 = scmp.ne.s32.totalorder %s99, %s113
      %p115 = scmp.eq.s32.totalorder %s33, 0
      %p116 = por %p114, %p115
      %s118 = sadd.s32 %s117, 1
      %p121 = scmp.eq.s32.totalorder %s27, 1
      %p122 = scmp.ne.s32.totalorder %s117, %s119
      %p123 = scmp.eq.s32.totalorder %s27, 0
      %p124 = por %p122, %p123
      %p125 = scmp.ne.s32.totalorder %s117, %s119
      %p126 = scmp.eq.s32.totalorder %s32, 1
      %p127 = por %p125, %p126
      %p128 = scmp.ne.s32.totalorder %s119, %s120
      %p129 = scmp.eq.s32.totalorder %s32, 0
      %p130 = por %p128, %p129
      %p131 = scmp.ne.s32.totalorder %s119, %s120
      %p132 = scmp.eq.s32.totalorder %s33, 1
      %p133 = por %p131, %p132
      %p135 = scmp.ne.s32.totalorder %s120, %s134
      %p136 = scmp.eq.s32.totalorder %s33, 0
      %p137 = por %p135, %p136
      %s139 = sadd.s32 %s138, 1
      %p142 = scmp.eq.s32.totalorder %s27, 1
      %p143 = scmp.ne.s32.totalorder %s138, %s140
      %p144 = scmp.eq.s32.totalorder %s27, 0
      %p145 = por %p143, %p144
      %p146 = scmp.ne.s32.totalorder %s138, %s140
      %p147 = scmp.eq.s32.totalorder %s32, 1
      %p148 = por %p146, %p147
      %p149 = scmp.ne.s32.totalorder %s140, %s141
      %p150 = scmp.eq.s32.totalorder %s32, 0
      %p151 = por %p149, %p150
      %p152 = scmp.ne.s32.totalorder %s140, %s141
      %p153 = scmp.eq.s32.totalorder %s33, 1
      %p154 = por %p152, %p153
      %p156 = scmp.ne.s32.totalorder %s141, %s155
      %p157 = scmp.eq.s32.totalorder %s33, 0
      %p158 = por %p156, %p157
      %s160 = sadd.s32 %s159, 1
      %p163 = scmp.eq.s32.totalorder %s27, 1
      %p164 = scmp.ne.s32.totalorder %s159, %s161
      %p165 = scmp.eq.s32.totalorder %s27, 0
      %p166 = por %p164, %p165
      %p167 = scmp.ne.s32.totalorder %s159, %s161
      %p168 = scmp.eq.s32.totalorder %s32, 1
      %p169 = por %p167, %p168
      %p170 = scmp.ne.s32.totalorder %s161, %s162
      %p171 = scmp.eq.s32.totalorder %s32, 0
      %p172 = por %p170, %p171
      %p173 = scmp.ne.s32.totalorder %s161, %s162
      %p174 = scmp.eq.s32.totalorder %s33, 1
      %p175 = por %p173, %p174
      %p177 = scmp.ne.s32.totalorder %s162, %s176
      %p178 = scmp.eq.s32.totalorder %s33, 0
      %p179 = por %p177, %p178
      %s181 = sadd.s32 %s180, 1
      %p184 = scmp.eq.s32.totalorder %s27, 1
      %p185 = scmp.ne.s32.totalorder %s180, %s182
      %p186 = scmp.eq.s32.totalorder %s27, 0
      %p187 = por %p185, %p186
      %p188 = scmp.ne.s32.totalorder %s180, %s182
      %p189 = scmp.eq.s32.totalorder %s32, 1
      %p190 = por %p188, %p189
      %p191 = scmp.ne.s32.totalorder %s182, %s183
      %p192 = scmp.eq.s32.totalorder %s32, 0
      %p193 = por %p191, %p192
      %p194 = scmp.ne.s32.totalorder %s182, %s183
      %p195 = scmp.eq.s32.totalorder %s33, 1
      %p196 = por %p194, %p195
      %p198 = scmp.ne.s32.totalorder %s183, %s197
      %p199 = scmp.eq.s32.totalorder %s33, 0
      %p200 = por %p198, %p199
      %s201 = ssub.s32 %s34, %s46
      %s202 = ssub.s32 %s35, %s42
      %s203 = sor.u32 %s201, %s202
      %p204 = scmp.eq.s32.totalorder %s203, 0
      %s206 = sadd.s32 %s205, 1
      %s207 = scalar_select %p204, %s205, %s206
      %p210 = pneg %p204
      %p211 = scmp.eq.s32.totalorder %s27, 1
      %p212 = por %p210, %p211
      %p213 = scmp.ne.s32.totalorder %s205, %s208
      %p214 = scmp.eq.s32.totalorder %s27, 0
      %p215 = por %p213, %p214
      %p216 = scmp.ne.s32.totalorder %s205, %s208
      %p217 = scmp.eq.s32.totalorder %s32, 1
      %p218 = por %p216, %p217
      %p219 = scmp.ne.s32.totalorder %s208, %s209
      %p220 = scmp.eq.s32.totalorder %s32, 0
      %p221 = por %p219, %p220
      %p222 = scmp.ne.s32.totalorder %s208, %s209
      %p223 = scmp.eq.s32.totalorder %s33, 1
      %p224 = por %p222, %p223
      %p226 = scmp.ne.s32.totalorder %s209, %s225
      %p227 = scmp.eq.s32.totalorder %s33, 0
      %p228 = por %p226, %p227
      %s229 = ssub.s32 %s34, %s46
      %s230 = ssub.s32 %s35, %s42
      %s231 = sor.u32 %s229, %s230
      %p232 = scmp.eq.s32.totalorder %s231, 0
      %s234 = sadd.s32 %s233, 1
      %s235 = scalar_select %p232, %s233, %s234
      %p238 = pneg %p232
      %p239 = scmp.eq.s32.totalorder %s27, 1
      %p240 = por %p238, %p239
      %p241 = scmp.ne.s32.totalorder %s233, %s236
      %p242 = scmp.eq.s32.totalorder %s27, 0
      %p243 = por %p241, %p242
      %p244 = scmp.ne.s32.totalorder %s233, %s236
      %p245 = scmp.eq.s32.totalorder %s32, 1
      %p246 = por %p244, %p245
      %p247 = scmp.ne.s32.totalorder %s236, %s237
      %p248 = scmp.eq.s32.totalorder %s32, 0
      %p249 = por %p247, %p248
      %p250 = scmp.ne.s32.totalorder %s236, %s237
      %p251 = scmp.eq.s32.totalorder %s33, 1
      %p252 = por %p250, %p251
      %p254 = scmp.ne.s32.totalorder %s237, %s253
      %p255 = scmp.eq.s32.totalorder %s33, 0
      %p256 = por %p254, %p255
      %s257 = ssub.s32 %s34, %s46
      %s258 = ssub.s32 %s35, %s42
      %s259 = sor.u32 %s257, %s258
      %p260 = scmp.eq.s32.totalorder %s259, 0
      %s262 = sadd.s32 %s261, 1
      %s263 = scalar_select %p260, %s261, %s262
      %p266 = pneg %p260
      %p267 = scmp.eq.s32.totalorder %s27, 1
      %p268 = por %p266, %p267
      %p269 = scmp.ne.s32.totalorder %s261, %s264
      %p270 = scmp.eq.s32.totalorder %s27, 0
      %p271 = por %p269, %p270
      %p272 = scmp.ne.s32.totalorder %s261, %s264
      %p273 = scmp.eq.s32.totalorder %s32, 1
      %p274 = por %p272, %p273
      %p275 = scmp.ne.s32.totalorder %s264, %s265
      %p276 = scmp.eq.s32.totalorder %s32, 0
      %p277 = por %p275, %p276
      %p278 = scmp.ne.s32.totalorder %s264, %s265
      %p279 = scmp.eq.s32.totalorder %s33, 1
      %p280 = por %p278, %p279
      %p282 = scmp.ne.s32.totalorder %s265, %s281
      %p283 = scmp.eq.s32.totalorder %s33, 0
      %p284 = por %p282, %p283
      %p285 = scmp.le.s32.totalorder 1, %s27
      %p286 = scmp.lt.s32.totalorder %s27, 3
      %p287 = pnand %p285, %p286
      %p288 = pneg %p287
      // Predicated region
      $region9: #{tpu_custom_call.1} parent=5 // pred_check
        _
      $region10: #{tpu_custom_call.1} parent=5 // pred_check_branch
        %290 = sbr.rel (%p287) target = $region12
      $region11: #{tpu_custom_call.1} parent=5 // pred_region
        %s291 = ssub.s32 %s27, 1
        // Predicated region
        $region13: #{tpu_custom_call.1} parent=11 // pred_check
          %p292 = pneg %p88
        $region14: #{tpu_custom_call.1} parent=11 // pred_check_branch
          %294 = sbr.rel (%p292) target = $region16
        $region15: #{tpu_custom_call.1} parent=11 // pred_region
          %s296 = ssub.s32 256, 256
          %297 = vsyncadd [#allocation6], %s296
          %s298 = sshll.u32 [#allocation5], 4
          %s299 = int_to_ptr.vmem [resolvable:$true] %s298
          %304 = dma.hbm_to_vmem [thread:$0]  %s1, 256, %s299, [#allocation6], 64, 64, 4
        $region16: #{tpu_custom_call.1} parent=11 // pred_fallthru
          _
        // Predicated region
        $region17: #{tpu_custom_call.1} parent=11 // pred_check
          %p305 = pneg %p109
        $region18: #{tpu_custom_call.1} parent=11 // pred_check_branch
          %307 = sbr.rel (%p305) target = $region20
        $region19: #{tpu_custom_call.1} parent=11 // pred_region
          %s309 = ssub.s32 256, 256
          %310 = vsyncadd [#allocation6], %s309
          %s311 = sshll.u32 [#allocation7], 4
          %s312 = int_to_ptr.vmem [resolvable:$true] %s311
          %317 = dma.hbm_to_vmem [thread:$0]  %s2, 256, %s312, [#allocation6], 64, 64, 4
        $region20: #{tpu_custom_call.1} parent=11 // pred_fallthru
          _
        // Predicated region
        $region21: #{tpu_custom_call.1} parent=11 // pred_check
          %p318 = pneg %p130
        $region22: #{tpu_custom_call.1} parent=11 // pred_check_branch
          %320 = sbr.rel (%p318) target = $region24
        $region23: #{tpu_custom_call.1} parent=11 // pred_region
          %s322 = ssub.s32 256, 256
          %323 = vsyncadd [#allocation9], %s322
          %s324 = sshll.u32 [#allocation8], 4
          %s325 = int_to_ptr.vmem [resolvable:$true] %s324
          %330 = dma.hbm_to_vmem [thread:$0]  %s3, 256, %s325, [#allocation9], 64, 64, 4
        $region24: #{tpu_custom_call.1} parent=11 // pred_fallthru
          _
        // Predicated region
        $region25: #{tpu_custom_call.1} parent=11 // pred_check
          %p331 = pneg %p151
        $region26: #{tpu_custom_call.1} parent=11 // pred_check_branch
          %333 = sbr.rel (%p331) target = $region28
        $region27: #{tpu_custom_call.1} parent=11 // pred_region
          _
        $region28: #{tpu_custom_call.1} parent=11 // pred_fallthru
          _
        // Predicated region
        $region29: #{tpu_custom_call.1} parent=11 // pred_check
          %p334 = pneg %p172
        $region30: #{tpu_custom_call.1} parent=11 // pred_check_branch
          %336 = sbr.rel (%p334) target = $region32
        $region31: #{tpu_custom_call.1} parent=11 // pred_region
          _
        $region32: #{tpu_custom_call.1} parent=11 // pred_fallthru
          _
        // Predicated region
        $region33: #{tpu_custom_call.1} parent=11 // pred_check
          %p337 = pneg %p193
        $region34: #{tpu_custom_call.1} parent=11 // pred_check_branch
          %339 = sbr.rel (%p337) target = $region36
        $region35: #{tpu_custom_call.1} parent=11 // pred_region
          _
        $region36: #{tpu_custom_call.1} parent=11 // pred_fallthru
          _
      $region12: #{tpu_custom_call.1} parent=5 // pred_fallthru
        _
      %p340 = scmp.lt.s32.totalorder %s27, 2
      // Predicated region
      $region37: #{tpu_custom_call.1} parent=5 // pred_check
        %p341 = pneg %p340
      $region38: #{tpu_custom_call.1} parent=5 // pred_check_branch
        %343 = sbr.rel (%p341) target = $region40
      $region39: #{tpu_custom_call.1} parent=5 // pred_region
        // Predicated region
        $region41: #{tpu_custom_call.1} parent=39 // pred_check
          %p344 = pneg %p61
        $region42: #{tpu_custom_call.1} parent=39 // pred_check_branch
          %346 = sbr.rel (%p344) target = $region44
        $region43: #{tpu_custom_call.1} parent=39 // pred_region
          %s347 = sand.u32 %s51, 1
          %s348 = scalar_lea.sflag [#allocation3], %s347
          %s349 = sand.u32 %s51, 1
          %s350 = smul.addr %s349, 4
          %s351 = scalar_lea.vmem [#allocation2], %s350
          %s353 = ssub.s32 64, 64
          %354 = vsyncadd %s348, %s353
          %s355 = sadd.s32 %s35, %s34
          %s356 = smul.addr %s355, 64
          %s357 = scalar_lea.hbm %s0, %s356
          %s359 = sshll.u32 %s351, 4
          %s360 = int_to_ptr.vmem [resolvable:$true] %s359
          %362 = dma.hbm_to_vmem [thread:$0]  %s357, 64, %s360, %s348
        $region44: #{tpu_custom_call.1} parent=39 // pred_fallthru
          _
      $region40: #{tpu_custom_call.1} parent=5 // pred_fallthru
        _
      %p363 = scmp.le.s32.totalorder 1, %s27
      %p364 = scmp.lt.s32.totalorder %s27, 3
      %p365 = pnand %p363, %p364
      %p366 = pneg %p365
      // Predicated region
      $region45: #{tpu_custom_call.1} parent=5 // pred_check
        _
      $region46: #{tpu_custom_call.1} parent=5 // pred_check_branch
        %368 = sbr.rel (%p365) target = $region48
      $region47: #{tpu_custom_call.1} parent=5 // pred_region
        %s369 = ssub.s32 %s27, 1
        %s370 = sand.u32 %s54, 1
        %s371 = scalar_lea.sflag [#allocation3], %s370
        %s372 = sand.u32 %s54, 1
        %s373 = smul.addr %s372, 4
        %s374 = scalar_lea.vmem [#allocation2], %s373
        // Predicated region
        $region49: #{tpu_custom_call.1} parent=47 // pred_check
          %p375 = pneg %p67
        $region50: #{tpu_custom_call.1} parent=47 // pred_check_branch
          %377 = sbr.rel (%p375) target = $region52
        $region51: #{tpu_custom_call.1} parent=47 // pred_region
          %378 = dma.done %s371, 64
        $region52: #{tpu_custom_call.1} parent=47 // pred_fallthru
          _
        // Predicated region
        $region53: #{tpu_custom_call.1} parent=47 // pred_check
          %p379 = pneg %p88
        $region54: #{tpu_custom_call.1} parent=47 // pred_check_branch
          %381 = sbr.rel (%p379) target = $region56
        $region55: #{tpu_custom_call.1} parent=47 // pred_region
          %382 = dma.done [#allocation6], 256
        $region56: #{tpu_custom_call.1} parent=47 // pred_fallthru
          _
        // Predicated region
        $region57: #{tpu_custom_call.1} parent=47 // pred_check
          %p383 = pneg %p109
        $region58: #{tpu_custom_call.1} parent=47 // pred_check_branch
          %385 = sbr.rel (%p383) target = $region60
        $region59: #{tpu_custom_call.1} parent=47 // pred_region
          %386 = dma.done [#allocation6], 256
        $region60: #{tpu_custom_call.1} parent=47 // pred_fallthru
          _
        // Predicated region
        $region61: #{tpu_custom_call.1} parent=47 // pred_check
          %p387 = pneg %p130
        $region62: #{tpu_custom_call.1} parent=47 // pred_check_branch
          %389 = sbr.rel (%p387) target = $region64
        $region63: #{tpu_custom_call.1} parent=47 // pred_region
          %390 = dma.done [#allocation9], 256
        $region64: #{tpu_custom_call.1} parent=47 // pred_fallthru
          _
        %s391 = sand.u32 %s54, 1
        %s392 = scalar_lea.sflag [#allocation3], %s391
        %s393 = sand.u32 %s54, 1
        %s394 = smul.addr %s393, 4
        %s395 = scalar_lea.vmem [#allocation2], %s394
        %p396 = pneg %p67
        %p397 = pneg %p64
        %p398 = pneg %p88
        %p399 = pneg %p85
        %p400 = pneg %p109
        %p401 = pneg %p106
        %p402 = pneg %p130
        %p403 = pneg %p127
        %p404 = pneg %p151
        %p405 = pneg %p148
        %p406 = pneg %p172
        %p407 = pneg %p169
        %p408 = pneg %p193
        %p409 = pneg %p190
        %p410 = pneg %p221
        %p411 = pneg %p218
        %s412 = sand.u32 %s208, 1
        %s413 = scalar_lea.sflag [#allocation4], %s412
        %s414 = sand.u32 %s208, 1
        %s415 = smul.addr %s414, 16
        %s416 = scalar_lea.vmem [#allocation10], %s415
        %p417 = pneg %p249
        %p418 = pneg %p246
        %s419 = sand.u32 %s32, 1
        %s420 = scalar_lea.sflag [#allocation12], %s419
        %s421 = sand.u32 %s236, 1
        %s422 = smul.addr %s421, 16
        %s423 = scalar_lea.vmem [#allocation11], %s422
        %p424 = pneg %p277
        %p425 = pneg %p274
        %s426 = sand.u32 %s32, 1
        %s427 = scalar_lea.sflag [#allocation12], %s426
        %s428 = sand.u32 %s264, 1
        %s429 = smul.addr %s428, 16
        %s430 = scalar_lea.vmem [#allocation13], %s429
        %v432 = vld [vmem:[%s374] sm:$0xf]
        %v433 = vld [vmem:[#allocation5] sm:$0xf]
        %v434 = vld [vmem:[#allocation5 + $0x4] sm:$0xf]
        %v435 = vld [vmem:[#allocation5 + $0x8] sm:$0xf]
        %v436 = vld [vmem:[#allocation5 + $0xc] sm:$0xf]
        %v437 = vld [vmem:[%s4] sm:$0x1]
        %v439 = vlaneseq
        %v440 = vshrl.u32 %v439, 7
        %v441 = vsub.s32 0, %v440
        %v442 = vrot.slane %v437, %v441
        %v448 = vunpack.c.l.b16 %v433
        %v449 = vunpack.c.l.b16 %v434
        %v450 = vunpack.c.l.b16 %v435
        %v451 = vunpack.c.l.b16 %v436
        %v452 = vpack.c.b16 %v449, %v448
        %v453 = vpack.c.b16 %v451, %v450
        %vm456 = vcmask 261120
        %v458 = vsel %vm456, %v432, 0
        %460 = vmatprep.subr.bf16.mxu0 0
        %461 = vmatpush1.bf16.msra.mxu0 0
        %462 = vmatprep.subr.bf16.mxu0 0
        %463 = vmatpush1.bf16.msra.mxu0 0
        %464 = vmatprep.subr.bf16.mxu0 0
        %465 = vmatpush1.bf16.msra.mxu0 0
        %466 = vmatprep.subr.bf16.mxu0 0
        %467 = vmatpush1.bf16.msra.mxu0 0
        %468 = vmatprep.subr.bf16.mxu0 0
        %469 = vmatpush1.bf16.msra.mxu0 0
        %470 = vmatprep.subr.bf16.mxu0 0
        %471 = vmatpush1.bf16.msra.mxu0 0
        %472 = vmatprep.subr.bf16.mxu0 0
        %473 = vmatpush1.bf16.msra.mxu0 %v453
        %474 = vmatprep.subr.bf16.mxu0 0
        %475 = vmatpush1.bf16.msra.mxu0 %v452
        %476 = vmatprep.subr.bf16.mxu0 0
        %477 = vmatpush2.bf16.msra.mxu0 0
        %478 = vmatprep.subr.bf16.mxu0 0
        %479 = vmatpush2.bf16.msra.mxu0 0
        %480 = vmatprep.subr.bf16.mxu0 0
        %481 = vmatpush2.bf16.msra.mxu0 0
        %482 = vmatprep.subr.bf16.mxu0 0
        %483 = vmatpush2.bf16.msra.mxu0 0
        %484 = vmatprep.subr.bf16.mxu0 0
        %485 = vmatpush2.bf16.msra.mxu0 0
        %486 = vmatprep.subr.bf16.mxu0 0
        %487 = vmatpush2.bf16.msra.mxu0 0
        %488 = vmatprep.subr.bf16.mxu0 0
        %489 = vmatpush2.bf16.msra.mxu0 0
        %490 = vmatprep.subr.bf16.mxu0 0
        %491 = vmatpush2.bf16.msra.mxu0 0
        %492 = vmatprep.mubr.bf16.mxu0 0
        %493 = vmatmul.mubr.bf16.gmra.mxu0 %v458
        %v494 = vpop.f32.mrf.mxu0
        %v495 = vadd.f32 %v442, %v494
        %v496 = vpop.f32.mrf.mxu0
        %v497 = vpop.f32.mrf.mxu0
        %v498 = vpop.f32.mrf.mxu0
        %499 = vdwg.mxu0
        %v500 = vpack.c.bf16 %v495, %v495
        %vm501 = vcmask 60416
        %502 = vst.msk [vmem:[%s416] sm:$0xf] %vm501, %v500
        %v504 = vunpack.c.l.b16 %v500
        %v505 = vpack.c.b16 %v504, %v504
        %506 = vrot.lane.b32.xlu0 %v505, 120
        %v507 = vpop.permute.xlu0 %506
        %s509 = scalar_lea.vmem %s416, 4 [#allocation10]
        %510 = vst.msk [vmem:[%s509] sm:$0xf] %vm501, %v507
        %511 = vrot.lane.b32.xlu0 %v505, 112
        %v512 = vpop.permute.xlu0 %511
        %s514 = scalar_lea.vmem %s416, 8 [#allocation10]
        %515 = vst.msk [vmem:[%s514] sm:$0xf] %vm501, %v512
        %516 = vrot.lane.b32.xlu0 %v505, 104
        %v517 = vpop.permute.xlu0 %516
        %s519 = scalar_lea.vmem %s416, 12 [#allocation10]
        %520 = vst.msk [vmem:[%s519] sm:$0xf] %vm501, %v517
        %v521 = vld [vmem:[#allocation7] sm:$0xf]
        %v522 = vld [vmem:[#allocation7 + $0x4] sm:$0xf]
        %v523 = vld [vmem:[#allocation7 + $0x8] sm:$0xf]
        %v524 = vld [vmem:[#allocation7 + $0xc] sm:$0xf]
        %v525 = vld [vmem:[%s5] sm:$0x1]
        %v527 = vlaneseq
        %v528 = vshrl.u32 %v527, 7
        %v529 = vsub.s32 0, %v528
        %v530 = vrot.slane %v525, %v529
        %v536 = vunpack.c.l.b16 %v521
        %v537 = vunpack.c.l.b16 %v522
        %v538 = vunpack.c.l.b16 %v523
        %v539 = vunpack.c.l.b16 %v524
        %v540 = vpack.c.b16 %v537, %v536
        %v541 = vpack.c.b16 %v539, %v538
        %544 = vmatprep.subr.bf16.mxu0 0
        %545 = vmatpush1.bf16.msra.mxu0 0
        %546 = vmatprep.subr.bf16.mxu0 0
        %547 = vmatpush1.bf16.msra.mxu0 0
        %548 = vmatprep.subr.bf16.mxu0 0
        %549 = vmatpush1.bf16.msra.mxu0 0
        %550 = vmatprep.subr.bf16.mxu0 0
        %551 = vmatpush1.bf16.msra.mxu0 0
        %552 = vmatprep.subr.bf16.mxu0 0
        %553 = vmatpush1.bf16.msra.mxu0 0
        %554 = vmatprep.subr.bf16.mxu0 0
        %555 = vmatpush1.bf16.msra.mxu0 0
        %556 = vmatprep.subr.bf16.mxu0 0
        %557 = vmatpush1.bf16.msra.mxu0 %v541
        %558 = vmatprep.subr.bf16.mxu0 0
        %559 = vmatpush1.bf16.msra.mxu0 %v540
        %560 = vmatprep.subr.bf16.mxu0 0
        %561 = vmatpush2.bf16.msra.mxu0 0
        %562 = vmatprep.subr.bf16.mxu0 0
        %563 = vmatpush2.bf16.msra.mxu0 0
        %564 = vmatprep.subr.bf16.mxu0 0
        %565 = vmatpush2.bf16.msra.mxu0 0
        %566 = vmatprep.subr.bf16.mxu0 0
        %567 = vmatpush2.bf16.msra.mxu0 0
        %568 = vmatprep.subr.bf16.mxu0 0
        %569 = vmatpush2.bf16.msra.mxu0 0
        %570 = vmatprep.subr.bf16.mxu0 0
        %571 = vmatpush2.bf16.msra.mxu0 0
        %572 = vmatprep.subr.bf16.mxu0 0
        %573 = vmatpush2.bf16.msra.mxu0 0
        %574 = vmatprep.subr.bf16.mxu0 0
        %575 = vmatpush2.bf16.msra.mxu0 0
        %576 = vmatprep.mubr.bf16.mxu0 0
        %577 = vmatmul.mubr.bf16.gmra.mxu0 %v458
        %v578 = vpop.f32.mrf.mxu0
        %v579 = vadd.f32 %v530, %v578
        %v580 = vpop.f32.mrf.mxu0
        %v581 = vpop.f32.mrf.mxu0
        %v582 = vpop.f32.mrf.mxu0
        %583 = vdwg.mxu0
        %v584 = vpack.c.bf16 %v579, %v579
        %585 = vst.msk [vmem:[%s423] sm:$0xf] %vm501, %v584
        %v587 = vunpack.c.l.b16 %v584
        %v588 = vpack.c.b16 %v587, %v587
        %589 = vrot.lane.b32.xlu0 %v588, 120
        %v590 = vpop.permute.xlu0 %589
        %s592 = scalar_lea.vmem %s423, 4 [#allocation11]
        %593 = vst.msk [vmem:[%s592] sm:$0xf] %vm501, %v590
        %594 = vrot.lane.b32.xlu0 %v588, 112
        %v595 = vpop.permute.xlu0 %594
        %s597 = scalar_lea.vmem %s423, 8 [#allocation11]
        %598 = vst.msk [vmem:[%s597] sm:$0xf] %vm501, %v595
        %599 = vrot.lane.b32.xlu0 %v588, 104
        %v600 = vpop.permute.xlu0 %599
        %s602 = scalar_lea.vmem %s423, 12 [#allocation11]
        %603 = vst.msk [vmem:[%s602] sm:$0xf] %vm501, %v600
        %v604 = vld [vmem:[#allocation8] sm:$0xf]
        %v605 = vld [vmem:[#allocation8 + $0x4] sm:$0xf]
        %v606 = vld [vmem:[#allocation8 + $0x8] sm:$0xf]
        %v607 = vld [vmem:[#allocation8 + $0xc] sm:$0xf]
        %v608 = vld [vmem:[%s6] sm:$0x1]
        %v610 = vlaneseq
        %v611 = vshrl.u32 %v610, 7
        %v612 = vsub.s32 0, %v611
        %v613 = vrot.slane %v608, %v612
        %v619 = vunpack.c.l.b16 %v604
        %v620 = vunpack.c.l.b16 %v605
        %v621 = vunpack.c.l.b16 %v606
        %v622 = vunpack.c.l.b16 %v607
        %v623 = vpack.c.b16 %v620, %v619
        %v624 = vpack.c.b16 %v622, %v621
        %627 = vmatprep.subr.bf16.mxu0 0
        %628 = vmatpush1.bf16.msra.mxu0 0
        %629 = vmatprep.subr.bf16.mxu0 0
        %630 = vmatpush1.bf16.msra.mxu0 0
        %631 = vmatprep.subr.bf16.mxu0 0
        %632 = vmatpush1.bf16.msra.mxu0 0
        %633 = vmatprep.subr.bf16.mxu0 0
        %634 = vmatpush1.bf16.msra.mxu0 0
        %635 = vmatprep.subr.bf16.mxu0 0
        %636 = vmatpush1.bf16.msra.mxu0 0
        %637 = vmatprep.subr.bf16.mxu0 0
        %638 = vmatpush1.bf16.msra.mxu0 0
        %639 = vmatprep.subr.bf16.mxu0 0
        %640 = vmatpush1.bf16.msra.mxu0 %v624
        %641 = vmatprep.subr.bf16.mxu0 0
        %642 = vmatpush1.bf16.msra.mxu0 %v623
        %643 = vmatprep.subr.bf16.mxu0 0
        %644 = vmatpush2.bf16.msra.mxu0 0
        %645 = vmatprep.subr.bf16.mxu0 0
        %646 = vmatpush2.bf16.msra.mxu0 0
        %647 = vmatprep.subr.bf16.mxu0 0
        %648 = vmatpush2.bf16.msra.mxu0 0
        %649 = vmatprep.subr.bf16.mxu0 0
        %650 = vmatpush2.bf16.msra.mxu0 0
        %651 = vmatprep.subr.bf16.mxu0 0
        %652 = vmatpush2.bf16.msra.mxu0 0
        %653 = vmatprep.subr.bf16.mxu0 0
        %654 = vmatpush2.bf16.msra.mxu0 0
        %655 = vmatprep.subr.bf16.mxu0 0
        %656 = vmatpush2.bf16.msra.mxu0 0
        %657 = vmatprep.subr.bf16.mxu0 0
        %658 = vmatpush2.bf16.msra.mxu0 0
        %659 = vmatprep.mubr.bf16.mxu0 0
        %660 = vmatmul.mubr.bf16.gmra.mxu0 %v458
        %v661 = vpop.f32.mrf.mxu0
        %v662 = vadd.f32 %v613, %v661
        %v663 = vpop.f32.mrf.mxu0
        %v664 = vpop.f32.mrf.mxu0
        %v665 = vpop.f32.mrf.mxu0
        %666 = vdwg.mxu0
        %v667 = vpack.c.bf16 %v662, %v662
        %668 = vst.msk [vmem:[%s430] sm:$0xf] %vm501, %v667
        %v670 = vunpack.c.l.b16 %v667
        %v671 = vpack.c.b16 %v670, %v670
        %672 = vrot.lane.b32.xlu0 %v671, 120
        %v673 = vpop.permute.xlu0 %672
        %s675 = scalar_lea.vmem %s430, 4 [#allocation13]
        %676 = vst.msk [vmem:[%s675] sm:$0xf] %vm501, %v673
        %677 = vrot.lane.b32.xlu0 %v671, 112
        %v678 = vpop.permute.xlu0 %677
        %s680 = scalar_lea.vmem %s430, 8 [#allocation13]
        %681 = vst.msk [vmem:[%s680] sm:$0xf] %vm501, %v678
        %682 = vrot.lane.b32.xlu0 %v671, 104
        %v683 = vpop.permute.xlu0 %682
        %s685 = scalar_lea.vmem %s430, 12 [#allocation13]
        %686 = vst.msk [vmem:[%s685] sm:$0xf] %vm501, %v683
        %s687 = sand.u32 %s208, 1
        %s688 = scalar_lea.sflag [#allocation4], %s687
        %s689 = sand.u32 %s208, 1
        %s690 = smul.addr %s689, 16
        %s691 = scalar_lea.vmem [#allocation10], %s690
        %s692 = sand.u32 %s32, 1
        %s693 = scalar_lea.sflag [#allocation12], %s692
        %s694 = sand.u32 %s236, 1
        %s695 = smul.addr %s694, 16
        %s696 = scalar_lea.vmem [#allocation11], %s695
        %s697 = sand.u32 %s32, 1
        %s698 = scalar_lea.sflag [#allocation12], %s697
        %s699 = sand.u32 %s264, 1
        %s700 = smul.addr %s699, 16
        %s701 = scalar_lea.vmem [#allocation13], %s700
        // Predicated region
        $region65: #{tpu_custom_call.1} parent=47 // pred_check
          %p702 = pneg %p218
        $region66: #{tpu_custom_call.1} parent=47 // pred_check_branch
          %704 = sbr.rel (%p702) target = $region68
        $region67: #{tpu_custom_call.1} parent=47 // pred_region
          %s706 = ssub.s32 256, 256
          %707 = vsyncadd %s688, %s706
          %s708 = smul.addr %s36, 4
          %s709 = sadd.s32 %s37, %s708
          %s710 = smul.addr %s709, 64
          %s711 = scalar_lea.hbm %s7, %s710
          %s712 = sshll.u32 %s691, 4
          %s713 = int_to_ptr.vmem [resolvable:$true] %s712
          %718 = dma.vmem_to_hbm [thread:$0]  %s713, 256, %s711, %s688, 64, 64, 4
        $region68: #{tpu_custom_call.1} parent=47 // pred_fallthru
          _
        // Predicated region
        $region69: #{tpu_custom_call.1} parent=47 // pred_check
          %p719 = pneg %p246
        $region70: #{tpu_custom_call.1} parent=47 // pred_check_branch
          %721 = sbr.rel (%p719) target = $region72
        $region71: #{tpu_custom_call.1} parent=47 // pred_region
          %s723 = ssub.s32 256, 256
          %724 = vsyncadd %s693, %s723
          %s725 = smul.addr %s36, 4
          %s726 = sadd.s32 %s37, %s725
          %s727 = smul.addr %s726, 64
          %s728 = scalar_lea.hbm %s8, %s727
          %s729 = sshll.u32 %s696, 4
          %s730 = int_to_ptr.vmem [resolvable:$true] %s729
          %735 = dma.vmem_to_hbm [thread:$0]  %s730, 256, %s728, %s693, 64, 64, 4
        $region72: #{tpu_custom_call.1} parent=47 // pred_fallthru
          _
        // Predicated region
        $region73: #{tpu_custom_call.1} parent=47 // pred_check
          %p736 = pneg %p274
        $region74: #{tpu_custom_call.1} parent=47 // pred_check_branch
          %738 = sbr.rel (%p736) target = $region76
        $region75: #{tpu_custom_call.1} parent=47 // pred_region
          %s740 = ssub.s32 256, 256
          %741 = vsyncadd %s698, %s740
          %s742 = smul.addr %s36, 4
          %s743 = sadd.s32 %s37, %s742
          %s744 = smul.addr %s743, 64
          %s745 = scalar_lea.hbm %s9, %s744
          %s746 = sshll.u32 %s701, 4
          %s747 = int_to_ptr.vmem [resolvable:$true] %s746
          %752 = dma.vmem_to_hbm [thread:$0]  %s747, 256, %s745, %s698, 64, 64, 4
        $region76: #{tpu_custom_call.1} parent=47 // pred_fallthru
          _
      $region48: #{tpu_custom_call.1} parent=5 // pred_fallthru
        _
      %p753 = scmp.le.s32.totalorder 2, %s27
      // Predicated region
      $region77: #{tpu_custom_call.1} parent=5 // pred_check
        %p754 = pneg %p753
      $region78: #{tpu_custom_call.1} parent=5 // pred_check_branch
        %756 = sbr.rel (%p754) target = $region80
      $region79: #{tpu_custom_call.1} parent=5 // pred_region
        %s757 = ssub.s32 %s27, 2
        // Predicated region
        $region81: #{tpu_custom_call.1} parent=79 // pred_check
          %p758 = pneg %p224
        $region82: #{tpu_custom_call.1} parent=79 // pred_check_branch
          %760 = sbr.rel (%p758) target = $region84
        $region83: #{tpu_custom_call.1} parent=79 // pred_region
          %s761 = sand.u32 %s209, 1
          %s762 = scalar_lea.sflag [#allocation4], %s761
          %s763 = sand.u32 %s209, 1
          %s764 = smul.addr %s763, 16
          %s765 = scalar_lea.vmem [#allocation10], %s764
          %766 = dma.done %s762, 256
        $region84: #{tpu_custom_call.1} parent=79 // pred_fallthru
          _
        // Predicated region
        $region85: #{tpu_custom_call.1} parent=79 // pred_check
          %p767 = pneg %p252
        $region86: #{tpu_custom_call.1} parent=79 // pred_check_branch
          %769 = sbr.rel (%p767) target = $region88
        $region87: #{tpu_custom_call.1} parent=79 // pred_region
          %s770 = sand.u32 %s33, 1
          %s771 = scalar_lea.sflag [#allocation12], %s770
          %s772 = sand.u32 %s237, 1
          %s773 = smul.addr %s772, 16
          %s774 = scalar_lea.vmem [#allocation11], %s773
          %775 = dma.done %s771, 256
        $region88: #{tpu_custom_call.1} parent=79 // pred_fallthru
          _
        // Predicated region
        $region89: #{tpu_custom_call.1} parent=79 // pred_check
          %p776 = pneg %p280
        $region90: #{tpu_custom_call.1} parent=79 // pred_check_branch
          %778 = sbr.rel (%p776) target = $region92
        $region91: #{tpu_custom_call.1} parent=79 // pred_region
          %s779 = sand.u32 %s33, 1
          %s780 = scalar_lea.sflag [#allocation12], %s779
          %s781 = sand.u32 %s265, 1
          %s782 = smul.addr %s781, 16
          %s783 = scalar_lea.vmem [#allocation13], %s782
          %784 = dma.done %s780, 256
        $region92: #{tpu_custom_call.1} parent=79 // pred_fallthru
          _
      $region80: #{tpu_custom_call.1} parent=5 // pred_fallthru
        _
    $region6: #{tpu_custom_call.1} parent=1 // loop_footer
      %s31 = sadd.s32 1, %s27
    $region7: #{tpu_custom_call.1} parent=1 // loop_footer_branch
      %26 = sbr.rel target = $region3
    $region8: #{tpu_custom_call.1} parent=1 // loop_exit
      _
    %785 = vsyncpa [#allocation3], 1
    %s786 = scalar_lea.sflag [#allocation3], 1
    %787 = vsyncpa %s786, 1
    %788 = vsyncpa [#allocation6], 1
    %789 = vsyncpa [#allocation9], 1
    %790 = vsyncpa [#allocation4], 1
    %s791 = scalar_lea.sflag [#allocation4], 1
    %792 = vsyncpa %s791, 1
    %793 = vsyncpa [#allocation12], 1
    %s794 = scalar_lea.sflag [#allocation12], 1
    %795 = vsyncpa %s794, 1

</llo_original>
